<compile_context>
chip_gen: v7x
topology: tpu7x:2x2x1
jax: 0.10.0
libtpu: 0.0.40
codegen_flags: <defaults>
</compile_context>

<pallas_src>
import jax
import jax.numpy as jnp
from jax.experimental import pallas as pl
from jax.experimental.pallas import tpu as pltpu

H = W = 14
NPIX = H * W          # 196  (matches nn.Linear(14*14, 1))
C_ENC = 384           # channels out of densenet161 features[0:8]
MAX_TILE_N = 32       # v7x-safe: 2 x 32*196*384*4B ~= 19 MiB double-buffered feat


def _deeppixbis_head_kernel(feat_ref, wdec_ref, bdec_ref, wlin_ref, blin_ref,
                            out_map_ref, out_dec_ref):
    # feat_ref    : (TN, 196, 384) VMEM  encoder features (pixels x channels), f32/bf16
    # wdec_ref    : (1, 1, 384)    VMEM  1x1-conv weight (resident across grid)
    # bdec_ref    : (1,)           SMEM  1x1-conv bias
    # wlin_ref    : (196, 1)       VMEM  linear weight, transposed (resident)
    # blin_ref    : (1,)           SMEM  linear bias
    # out_map_ref : (TN, 196)      VMEM  sigmoid(1x1 conv)  (flattened H*W, lane-dense)
    # out_dec_ref : (TN, 1)        VMEM  sigmoid(linear)
    tn = feat_ref.shape[0]
    feat = feat_ref[...]                                        # (TN, 196, 384)
    wdec = jnp.broadcast_to(wdec_ref[...], (tn, 1, C_ENC))      # (TN, 1, 384)

    # 1x1 conv over channels == per-pixel dot with the 384-vector.
    # Batched MXU matmul: (TN,1,384) x (TN,196,384) -> (TN,1,196), f32 accumulate.
    logits = jnp.einsum("noc,npc->nop", wdec, feat,
                        preferred_element_type=jnp.float32)[:, 0, :]   # (TN, 196)
    out_map = jax.nn.sigmoid(logits + bdec_ref[0])
    out_map_ref[...] = out_map

    # Linear(196 -> 1) on the sigmoid map: plain 2D MXU matmul.
    lin_logit = jnp.dot(out_map, wlin_ref[...],
                        preferred_element_type=jnp.float32) + blin_ref[0]  # (TN, 1)
    out_dec_ref[...] = jax.nn.sigmoid(lin_logit)


def deeppixbis_head(enc_feat_nhwc, w_dec, b_dec, w_lin, b_lin, *, tile_n=MAX_TILE_N):
    """enc_feat_nhwc: (N, 14, 14, 384) f32 or bf16.

    Returns (out_map NCHW (N,1,14,14) f32, dec (N,1) f32)."""
    N = enc_feat_nhwc.shape[0]
    feat = enc_feat_nhwc.reshape(N, NPIX, C_ENC)
    compute_dtype = feat.dtype

    # Batch tile: whole batch if small, else a multiple of 8 (sublane rule on outputs).
    if N <= tile_n:
        tn = N
    else:
        tn = max(8, (min(tile_n, MAX_TILE_N) // 8) * 8)
    grid_n = pl.cdiv(N, tn)

    # Pre-cast / pre-shape the parameters once in the wrapper (no per-step casts).
    wdec3 = w_dec.reshape(1, 1, C_ENC).astype(compute_dtype)    # conv weight
    wlin_t = w_lin.reshape(NPIX, 1).astype(jnp.float32)         # linear weight^T
    bdec_s = b_dec.reshape(1).astype(jnp.float32)
    blin_s = b_lin.reshape(1).astype(jnp.float32)

    out_map_flat, dec = pl.pallas_call(
        _deeppixbis_head_kernel,
        grid=(grid_n,),
        out_shape=(
            jax.ShapeDtypeStruct((N, NPIX), jnp.float32),
            jax.ShapeDtypeStruct((N, 1), jnp.float32),
        ),
        in_specs=[
            pl.BlockSpec((tn, NPIX, C_ENC), lambda i: (i, 0, 0)),          # feat (tiled)
            pl.BlockSpec((1, 1, C_ENC), lambda i: (0, 0, 0)),              # w_dec (resident)
            pl.BlockSpec(memory_space=pltpu.MemorySpace.SMEM),             # b_dec
            pl.BlockSpec((NPIX, 1), lambda i: (0, 0)),                     # w_lin^T (resident)
            pl.BlockSpec(memory_space=pltpu.MemorySpace.SMEM),             # b_lin
        ],
        out_specs=(
            pl.BlockSpec((tn, NPIX), lambda i: (i, 0)),
            pl.BlockSpec((tn, 1), lambda i: (i, 0)),
        ),
        compiler_params=pltpu.CompilerParams(
            dimension_semantics=("parallel",),        # megacore sharding on v7x
            vmem_limit_bytes=48 * 1024 * 1024,        # room for big tiles on v5e/v6e, < v7x phys
        ),
    )(feat, wdec3, bdec_s, wlin_t, blin_s)

    # PyTorch: out_map has shape (N, 1, 14, 14); view(-1, 196) flattens H,W
    # row-major, which matches our (N, 196) pixel ordering.
    out_map = out_map_flat.reshape(N, 1, H, W)
    return out_map, dec


def _reference(enc_feat_nhwc, w_dec, b_dec, w_lin, b_lin):
    N = enc_feat_nhwc.shape[0]
    feat = enc_feat_nhwc.reshape(N, NPIX, C_ENC).astype(jnp.float32)
    logits = jnp.sum(feat * w_dec.reshape(1, 1, C_ENC), axis=-1) + b_dec[0]
    out_map = jax.nn.sigmoid(logits)
    dec = jax.nn.sigmoid(out_map @ w_lin.reshape(NPIX, 1) + b_lin[0])
    return out_map.reshape(N, 1, H, W), dec


if __name__ == "__main__":
    key = jax.random.PRNGKey(0)
    k_feat, k_wd, k_bd, k_wl, k_bl = jax.random.split(key, 5)

    N = 16
    # Synthetic encoder output (stands in for densenet161 features[0:8](x)).
    enc_feat = jax.random.normal(k_feat, (N, H, W, C_ENC), dtype=jnp.float32)

    # Deterministic parameter init (shapes from the module's __init__):
    #   dec    = nn.Conv2d(384, 1, 1) -> weight (1,384,1,1), bias (1,)
    #   linear = nn.Linear(196, 1)    -> weight (1,196),     bias (1,)
    w_dec = jax.random.normal(k_wd, (1, C_ENC), jnp.float32) * 0.05
    b_dec = jax.random.normal(k_bd, (1,), jnp.float32) * 0.05
    w_lin = jax.random.normal(k_wl, (1, NPIX), jnp.float32) * 0.05
    b_lin = jax.random.normal(k_bl, (1,), jnp.float32) * 0.05

    ref_map, ref_dec = _reference(enc_feat, w_dec, b_dec, w_lin, b_lin)

    # f32 path, tile_n=8 -> 2 grid steps: exercises the pipelined batch grid.
    out_map, dec = deeppixbis_head(enc_feat, w_dec, b_dec, w_lin, b_lin, tile_n=8)
    jax.block_until_ready((out_map, dec))
    assert out_map.shape == (N, 1, H, W), out_map.shape
    assert dec.shape == (N, 1), dec.shape
    assert jnp.allclose(out_map, ref_map, atol=2e-3), float(jnp.max(jnp.abs(out_map - ref_map)))
    assert jnp.allclose(dec, ref_dec, atol=2e-3), float(jnp.max(jnp.abs(dec - ref_dec)))

    # bf16 feature path (halves HBM traffic on the dominant input); loose tolerance.
    out_map_bf, dec_bf = deeppixbis_head(enc_feat.astype(jnp.bfloat16),
                                         w_dec, b_dec, w_lin, b_lin)
    jax.block_until_ready((out_map_bf, dec_bf))
    assert jnp.allclose(out_map_bf, ref_map, atol=2e-2)
    assert jnp.allclose(dec_bf, ref_dec, atol=2e-2)

    print("KERNEL_OK")
</pallas_src>

<mosaic_0001>
module attributes {stable_mosaic.version = 11 : i64} {
  func.func @_deeppixbis_head_kernel(%arg0: i32, %arg1: memref<8x196x384xf32, #tpu.memory_space<vmem>>, %arg2: memref<1x1x384xf32, #tpu.memory_space<vmem>>, %arg3: memref<1xf32, #tpu.memory_space<smem>>, %arg4: memref<196x1xf32, #tpu.memory_space<vmem>>, %arg5: memref<1xf32, #tpu.memory_space<smem>>, %arg6: memref<8x196xf32, #tpu.memory_space<vmem>>, %arg7: memref<8x1xf32, #tpu.memory_space<vmem>>) attributes {dimension_semantics = [#tpu.dimension_semantics<parallel>], iteration_bounds = array<i64: 2>, scalar_prefetch = 0 : i64, scratch_operands = 0 : i64, tpu.core_type = #tpu.core_type<tc>, window_params = [{transform_indices = @transform_0, window_bounds = array<i64: 8, 196, 384>}, {pipeline_mode = #tpu.pipeline_mode<synchronous>, transform_indices = @transform_1, window_bounds = array<i64: 1, 1, 384>}, {transform_indices = @transform_2, window_bounds = array<i64: 1>}, {pipeline_mode = #tpu.pipeline_mode<synchronous>, transform_indices = @transform_3, window_bounds = array<i64: 196, 1>}, {transform_indices = @transform_4, window_bounds = array<i64: 1>}, {transform_indices = @transform_5, window_bounds = array<i64: 8, 196>}, {transform_indices = @transform_6, window_bounds = array<i64: 8, 1>}]} {
    %c0 = arith.constant 0 : index
    %c0_0 = arith.constant 0 : index
    %c0_1 = arith.constant 0 : index
    %0 = vector.load %arg1[%c0, %c0_0, %c0_1] : memref<8x196x384xf32, #tpu.memory_space<vmem>>, vector<8x196x384xf32>
    %c0_2 = arith.constant 0 : index
    %c0_3 = arith.constant 0 : index
    %c0_4 = arith.constant 0 : index
    %1 = vector.load %arg2[%c0_2, %c0_3, %c0_4] : memref<1x1x384xf32, #tpu.memory_space<vmem>>, vector<1x1x384xf32>
    %2 = vector.shape_cast %1 : vector<1x1x384xf32> to vector<1x1x384xf32>
    %3 = vector.broadcast %2 : vector<1x1x384xf32> to vector<8x1x384xf32>
    "tpu.trace_start"() <{level = 10 : i32, message = "noc,npc->nop"}> : () -> ()
    %cst = arith.constant dense<0.000000e+00> : vector<8x1x196xf32>
    %4 = tpu.matmul %3, %0, %cst {dimension_numbers = #tpu.dot_dimension_numbers<[2], [2], [1], [1], [0, 0, 0, 1, 1, 1], [0], [0]>} : vector<8x1x384xf32>, vector<8x196x384xf32>, vector<8x1x196xf32> -> vector<8x1x196xf32>
    "tpu.trace_stop"() : () -> ()
    %5 = vector.shape_cast %4 : vector<8x1x196xf32> to vector<8x196xf32>
    %c0_5 = arith.constant 0 : index
    %6 = memref.load %arg3[%c0_5] : memref<1xf32, #tpu.memory_space<smem>>
    %7 = vector.broadcast %6 : f32 to vector<8x196xf32>
    %8 = arith.addf %5, %7 : vector<8x196xf32>
    %9 = arith.negf %8 : vector<8x196xf32>
    %10 = math.exp %9 : vector<8x196xf32>
    %cst_6 = arith.constant 1.000000e+00 : f32
    %11 = vector.broadcast %cst_6 : f32 to vector<8x196xf32>
    %12 = arith.addf %11, %10 : vector<8x196xf32>
    %13 = arith.divf %11, %12 : vector<8x196xf32>
    %c0_7 = arith.constant 0 : index
    %c0_8 = arith.constant 0 : index
    %14 = vector.load %arg6[%c0_7, %c0_8] : memref<8x196xf32, #tpu.memory_space<vmem>>, vector<8x196xf32>
    tpu.vector_store %arg6[%c0_7, %c0_8], %13 {strides = array<i32>} : memref<8x196xf32, #tpu.memory_space<vmem>>, vector<8x196xf32>,
    %c0_9 = arith.constant 0 : index
    %c0_10 = arith.constant 0 : index
    %15 = vector.load %arg4[%c0_9, %c0_10] : memref<196x1xf32, #tpu.memory_space<vmem>>, vector<196x1xf32>
    %cst_11 = arith.constant dense<0.000000e+00> : vector<8x1xf32>
    %16 = tpu.matmul %13, %15, %cst_11 {dimension_numbers = #tpu.dot_dimension_numbers<[1], [0], [0], [1], [0, 0, 1, 1], [], []>} : vector<8x196xf32>, vector<196x1xf32>, vector<8x1xf32> -> vector<8x1xf32>
    %c0_12 = arith.constant 0 : index
    %17 = memref.load %arg5[%c0_12] : memref<1xf32, #tpu.memory_space<smem>>
    %18 = vector.broadcast %17 : f32 to vector<8x1xf32>
    %19 = arith.addf %16, %18 : vector<8x1xf32>
    %20 = arith.negf %19 : vector<8x1xf32>
    %21 = math.exp %20 : vector<8x1xf32>
    %cst_13 = arith.constant 1.000000e+00 : f32
    %22 = vector.broadcast %cst_13 : f32 to vector<8x1xf32>
    %23 = arith.addf %22, %21 : vector<8x1xf32>
    %24 = arith.divf %22, %23 : vector<8x1xf32>
    %c0_14 = arith.constant 0 : index
    %c0_15 = arith.constant 0 : index
    %25 = vector.load %arg7[%c0_14, %c0_15] : memref<8x1xf32, #tpu.memory_space<vmem>>, vector<8x1xf32>
    tpu.vector_store %arg7[%c0_14, %c0_15], %24 {strides = array<i32>} : memref<8x1xf32, #tpu.memory_space<vmem>>, vector<8x1xf32>,
    return
  }
  func.func @transform_0(%arg0: i32) -> (i32, i32, i32) {
    %c0_i32 = arith.constant 0 : i32
    %c0_i32_0 = arith.constant 0 : i32
    %c0_i32_1 = arith.constant 0 : i32
    return %arg0, %c0_i32, %c0_i32_0 : i32, i32, i32
  }
  func.func @transform_1(%arg0: i32) -> (i32, i32, i32) {
    %c0_i32 = arith.constant 0 : i32
    %c0_i32_0 = arith.constant 0 : i32
    %c0_i32_1 = arith.constant 0 : i32
    %c0_i32_2 = arith.constant 0 : i32
    return %c0_i32, %c0_i32_0, %c0_i32_1 : i32, i32, i32
  }
  func.func @transform_2(%arg0: i32) -> i32 {
    %c0_i32 = arith.constant 0 : i32
    %c0_i32_0 = arith.constant 0 : i32
    return %c0_i32 : i32
  }
  func.func @transform_3(%arg0: i32) -> (i32, i32) {
    %c0_i32 = arith.constant 0 : i32
    %c0_i32_0 = arith.constant 0 : i32
    %c0_i32_1 = arith.constant 0 : i32
    return %c0_i32, %c0_i32_0 : i32, i32
  }
  func.func @transform_4(%arg0: i32) -> i32 {
    %c0_i32 = arith.constant 0 : i32
    %c0_i32_0 = arith.constant 0 : i32
    return %c0_i32 : i32
  }
  func.func @transform_5(%arg0: i32) -> (i32, i32) {
    %c0_i32 = arith.constant 0 : i32
    %c0_i32_0 = arith.constant 0 : i32
    return %arg0, %c0_i32 : i32, i32
  }
  func.func @transform_6(%arg0: i32) -> (i32, i32) {
    %c0_i32 = arith.constant 0 : i32
    %c0_i32_0 = arith.constant 0 : i32
    return %arg0, %c0_i32 : i32, i32
  }
}

</mosaic_0001>

<llo_original>
// kernel: tpu_custom_call.1
$region0: #{tpu_custom_call.1}
  #allocation0 [shape = 'u32[]', space=smem, size = 0x4, offset = 0x4, fixed_abs, tag = 'smem constant byte address 0x4 - core index']
  #allocation1 [shape = 'u32[144,128]{1,0:T(1,128)}', space=vmem, size = 0x12000, scoped, tag = 'internal scratch']
  #allocation2 [shape = 'f32[1]{0:T(128)S(6)}', space=smem, size = 0x200, scoped, tag = 'scoped memory for tpu_custom_call.1']
  #allocation3 [shape = 'f32[1]{0:T(128)S(6)}', space=smem, size = 0x200, scoped, tag = 'scoped memory for tpu_custom_call.1']
  %s0 = inlined_call_operand.vmem [shape: f32[16,196,384], index: 0, kind: input, shape index: {}]
  %s1 = inlined_call_operand.vmem [shape: f32[1,1,384], index: 1, kind: input, shape index: {}]
  %s2 = inlined_call_operand.<no memory space> [shape: f32[1], index: 2, kind: input, shape index: {}]
  %s3 = inlined_call_operand.vmem [shape: f32[196,1], index: 3, kind: input, shape index: {}]
  %s4 = inlined_call_operand.<no memory space> [shape: f32[1], index: 4, kind: input, shape index: {}]
  %s5 = inlined_call_operand.hbm [shape: f32[16,196], index: 5, kind: output, shape index: {0}]
  %s6 = inlined_call_operand.vmem [shape: f32[16,1], index: 6, kind: output, shape index: {1}]
  %7 = xla_tuple %s5, %s6
  %s8 = sld [smem:[#allocation0]]
  $region61: #{tpu_custom_call.1} parent=0
    _
  %s10 = ssub.s32 1, %s8
  %s11 = scalar_select 0, %s10, %s8
  %12 = sst [smem:[#allocation2]] %s2
  %13 = sst [smem:[#allocation3]] %s4
  $region1: #{tpu_custom_call.1} parent=0
    #allocation4 [shape = 'u8[16384]{0}', space=vmem, size = 0x4000, scoped, tag = 'output window, operand 0']
    #allocation5 [shape = 's32[2]{0}', space=sflag, size = 0x8, scoped, tag = 'scoped memory for tpu_custom_call.1']
    %14 = vsyncpa [#allocation5], 0
    %s15 = scalar_lea.sflag [#allocation5], 1
    %16 = vsyncpa %s15, 0
    loop: start=0, step=1, limit=4
    $region2: #{tpu_custom_call.1} parent=1 // loop_pre_header
      _
    $region3: #{tpu_custom_call.1} parent=1 // loop_header
      %s18 = sphi 0, %s22
      %p19 = scmp.ge.s32.totalorder %s18, 4
      %s28 = sphi 0, %s30
      %s31 = sphi 0, %s28
      %s32 = sphi 0, %s31
      %s48 = sphi 0, %s32
      %s52 = sphi 0, %s52
      %s54 = sphi 0, %s52
      %s55 = sphi 0, %s54
      %s69 = sphi 0, %s55
      %s73 = sphi 0, %s73
      %s75 = sphi 0, %s73
      %s76 = sphi 0, %s75
      %s90 = sphi 0, %s76
      %s94 = sphi 0, %s94
      %s96 = sphi 0, %s94
      %s97 = sphi 0, %s96
      %s111 = sphi 0, %s97
      %s115 = sphi 0, %s115
      %s117 = sphi 0, %s115
      %s118 = sphi 0, %s117
      %s132 = sphi 0, %s118
      %s138 = sphi 0, %s140
      %s141 = sphi 0, %s138
      %s142 = sphi 0, %s141
      %s158 = sphi 0, %s142
      %s164 = sphi 0, %s166
      %s167 = sphi 0, %s164
      %s168 = sphi 0, %s167
      %s184 = sphi 0, %s168
    $region4: #{tpu_custom_call.1} parent=1 // loop_header_branch
      %21 = sbr.rel (%p19) target = $region8
    $region5: #{tpu_custom_call.1} parent=1 // loop_body
      %s23 = ssub.s32 %s18, 1
      %s24 = ssub.s32 %s18, 2
      %s25 = sadd.s32 %s18, 1
      %s26 = ssub.s32 %s18, %s25
      %p27 = scmp.eq.s32.totalorder %s26, 0
      %s29 = sadd.s32 %s28, 1
      %s30 = scalar_select %p27, %s28, %s29
      %p33 = pneg %p27
      %p34 = scmp.eq.s32.totalorder %s18, 1
      %p35 = por %p33, %p34
      %p36 = scmp.ne.s32.totalorder %s28, %s31
      %p37 = scmp.eq.s32.totalorder %s18, 0
      %p38 = por %p36, %p37
      %p39 = scmp.ne.s32.totalorder %s28, %s31
      %p40 = scmp.eq.s32.totalorder %s23, 1
      %p41 = por %p39, %p40
      %p42 = scmp.ne.s32.totalorder %s31, %s32
      %p43 = scmp.eq.s32.totalorder %s23, 0
      %p44 = por %p42, %p43
      %p45 = scmp.ne.s32.totalorder %s31, %s32
      %p46 = scmp.eq.s32.totalorder %s24, 1
      %p47 = por %p45, %p46
      %p49 = scmp.ne.s32.totalorder %s32, %s48
      %p50 = scmp.eq.s32.totalorder %s24, 0
      %p51 = por %p49, %p50
      %s53 = sadd.s32 %s52, 1
      %p56 = scmp.eq.s32.totalorder %s18, 1
      %p57 = scmp.ne.s32.totalorder %s52, %s54
      %p58 = scmp.eq.s32.totalorder %s18, 0
      %p59 = por %p57, %p58
      %p60 = scmp.ne.s32.totalorder %s52, %s54
      %p61 = scmp.eq.s32.totalorder %s23, 1
      %p62 = por %p60, %p61
      %p63 = scmp.ne.s32.totalorder %s54, %s55
      %p64 = scmp.eq.s32.totalorder %s23, 0
      %p65 = por %p63, %p64
      %p66 = scmp.ne.s32.totalorder %s54, %s55
      %p67 = scmp.eq.s32.totalorder %s24, 1
      %p68 = por %p66, %p67
      %p70 = scmp.ne.s32.totalorder %s55, %s69
      %p71 = scmp.eq.s32.totalorder %s24, 0
      %p72 = por %p70, %p71
      %s74 = sadd.s32 %s73, 1
      %p77 = scmp.eq.s32.totalorder %s18, 1
      %p78 = scmp.ne.s32.totalorder %s73, %s75
      %p79 = scmp.eq.s32.totalorder %s18, 0
      %p80 = por %p78, %p79
      %p81 = scmp.ne.s32.totalorder %s73, %s75
      %p82 = scmp.eq.s32.totalorder %s23, 1
      %p83 = por %p81, %p82
      %p84 = scmp.ne.s32.totalorder %s75, %s76
      %p85 = scmp.eq.s32.totalorder %s23, 0
      %p86 = por %p84, %p85
      %p87 = scmp.ne.s32.totalorder %s75, %s76
      %p88 = scmp.eq.s32.totalorder %s24, 1
      %p89 = por %p87, %p88
      %p91 = scmp.ne.s32.totalorder %s76, %s90
      %p92 = scmp.eq.s32.totalorder %s24, 0
      %p93 = por %p91, %p92
      %s95 = sadd.s32 %s94, 1
      %p98 = scmp.eq.s32.totalorder %s18, 1
      %p99 = scmp.ne.s32.totalorder %s94, %s96
      %p100 = scmp.eq.s32.totalorder %s18, 0
      %p101 = por %p99, %p100
      %p102 = scmp.ne.s32.totalorder %s94, %s96
      %p103 = scmp.eq.s32.totalorder %s23, 1
      %p104 = por %p102, %p103
      %p105 = scmp.ne.s32.totalorder %s96, %s97
      %p106 = scmp.eq.s32.totalorder %s23, 0
      %p107 = por %p105, %p106
      %p108 = scmp.ne.s32.totalorder %s96, %s97
      %p109 = scmp.eq.s32.totalorder %s24, 1
      %p110 = por %p108, %p109
      %p112 = scmp.ne.s32.totalorder %s97, %s111
      %p113 = scmp.eq.s32.totalorder %s24, 0
      %p114 = por %p112, %p113
      %s116 = sadd.s32 %s115, 1
      %p119 = scmp.eq.s32.totalorder %s18, 1
      %p120 = scmp.ne.s32.totalorder %s115, %s117
      %p121 = scmp.eq.s32.totalorder %s18, 0
      %p122 = por %p120, %p121
      %p123 = scmp.ne.s32.totalorder %s115, %s117
      %p124 = scmp.eq.s32.totalorder %s23, 1
      %p125 = por %p123, %p124
      %p126 = scmp.ne.s32.totalorder %s117, %s118
      %p127 = scmp.eq.s32.totalorder %s23, 0
      %p128 = por %p126, %p127
      %p129 = scmp.ne.s32.totalorder %s117, %s118
      %p130 = scmp.eq.s32.totalorder %s24, 1
      %p131 = por %p129, %p130
      %p133 = scmp.ne.s32.totalorder %s118, %s132
      %p134 = scmp.eq.s32.totalorder %s24, 0
      %p135 = por %p133, %p134
      %s136 = ssub.s32 %s18, %s25
      %p137 = scmp.eq.s32.totalorder %s136, 0
      %s139 = sadd.s32 %s138, 1
      %s140 = scalar_select %p137, %s138, %s139
      %p143 = pneg %p137
      %p144 = scmp.eq.s32.totalorder %s18, 1
      %p145 = por %p143, %p144
      %p146 = scmp.ne.s32.totalorder %s138, %s141
      %p147 = scmp.eq.s32.totalorder %s18, 0
      %p148 = por %p146, %p147
      %p149 = scmp.ne.s32.totalorder %s138, %s141
      %p150 = scmp.eq.s32.totalorder %s23, 1
      %p151 = por %p149, %p150
      %p152 = scmp.ne.s32.totalorder %s141, %s142
      %p153 = scmp.eq.s32.totalorder %s23, 0
      %p154 = por %p152, %p153
      %p155 = scmp.ne.s32.totalorder %s141, %s142
      %p156 = scmp.eq.s32.totalorder %s24, 1
      %p157 = por %p155, %p156
      %p159 = scmp.ne.s32.totalorder %s142, %s158
      %p160 = scmp.eq.s32.totalorder %s24, 0
      %p161 = por %p159, %p160
      %s162 = ssub.s32 %s18, %s25
      %p163 = scmp.eq.s32.totalorder %s162, 0
      %s165 = sadd.s32 %s164, 1
      %s166 = scalar_select %p163, %s164, %s165
      %p169 = pneg %p163
      %p170 = scmp.eq.s32.totalorder %s18, 1
      %p171 = por %p169, %p170
      %p172 = scmp.ne.s32.totalorder %s164, %s167
      %p173 = scmp.eq.s32.totalorder %s18, 0
      %p174 = por %p172, %p173
      %p175 = scmp.ne.s32.totalorder %s164, %s167
      %p176 = scmp.eq.s32.totalorder %s23, 1
      %p177 = por %p175, %p176
      %p178 = scmp.ne.s32.totalorder %s167, %s168
      %p179 = scmp.eq.s32.totalorder %s23, 0
      %p180 = por %p178, %p179
      %p181 = scmp.ne.s32.totalorder %s167, %s168
      %p182 = scmp.eq.s32.totalorder %s24, 1
      %p183 = por %p181, %p182
      %p185 = scmp.ne.s32.totalorder %s168, %s184
      %p186 = scmp.eq.s32.totalorder %s24, 0
      %p187 = por %p185, %p186
      %p188 = scmp.le.s32.totalorder 1, %s18
      %p189 = scmp.lt.s32.totalorder %s18, 3
      %p190 = pnand %p188, %p189
      %p191 = pneg %p190
      // Predicated region
      $region9: #{tpu_custom_call.1} parent=5 // pred_check
        _
      $region10: #{tpu_custom_call.1} parent=5 // pred_check_branch
        %193 = sbr.rel (%p190) target = $region12
      $region11: #{tpu_custom_call.1} parent=5 // pred_region
        %s194 = ssub.s32 %s18, 1
        // Predicated region
        $region13: #{tpu_custom_call.1} parent=11 // pred_check
          %p195 = pneg %p65
        $region14: #{tpu_custom_call.1} parent=11 // pred_check_branch
          %197 = sbr.rel (%p195) target = $region16
        $region15: #{tpu_custom_call.1} parent=11 // pred_region
          _
        $region16: #{tpu_custom_call.1} parent=11 // pred_fallthru
          _
        // Predicated region
        $region17: #{tpu_custom_call.1} parent=11 // pred_check
          %p198 = pneg %p86
        $region18: #{tpu_custom_call.1} parent=11 // pred_check_branch
          %200 = sbr.rel (%p198) target = $region20
        $region19: #{tpu_custom_call.1} parent=11 // pred_region
          _
        $region20: #{tpu_custom_call.1} parent=11 // pred_fallthru
          _
        // Predicated region
        $region21: #{tpu_custom_call.1} parent=11 // pred_check
          %p201 = pneg %p107
        $region22: #{tpu_custom_call.1} parent=11 // pred_check_branch
          %203 = sbr.rel (%p201) target = $region24
        $region23: #{tpu_custom_call.1} parent=11 // pred_region
          _
        $region24: #{tpu_custom_call.1} parent=11 // pred_fallthru
          _
        // Predicated region
        $region25: #{tpu_custom_call.1} parent=11 // pred_check
          %p204 = pneg %p128
        $region26: #{tpu_custom_call.1} parent=11 // pred_check_branch
          %206 = sbr.rel (%p204) target = $region28
        $region27: #{tpu_custom_call.1} parent=11 // pred_region
          _
        $region28: #{tpu_custom_call.1} parent=11 // pred_fallthru
          _
      $region12: #{tpu_custom_call.1} parent=5 // pred_fallthru
        _
      %p207 = scmp.lt.s32.totalorder %s18, 2
      // Predicated region
      $region29: #{tpu_custom_call.1} parent=5 // pred_check
        %p208 = pneg %p207
      $region30: #{tpu_custom_call.1} parent=5 // pred_check_branch
        %210 = sbr.rel (%p208) target = $region32
      $region31: #{tpu_custom_call.1} parent=5 // pred_region
        // Predicated region
        $region33: #{tpu_custom_call.1} parent=31 // pred_check
          %p211 = pneg %p38
        $region34: #{tpu_custom_call.1} parent=31 // pred_check_branch
          %213 = sbr.rel (%p211) target = $region36
        $region35: #{tpu_custom_call.1} parent=31 // pred_region
          %s214 = smul.u32 8, %s18
          %p215 = scmp.lt.s32.totalorder %s214, 15
          %s216 = scalar_select %p215, %s214, 15
          %s217 = smul.addr %s216, 75
          %s218 = smul.addr %s217, 8
          %s219 = scalar_lea.vmem %s0, %s218
          %s220 = smul.u32 8, %s18
        $region36: #{tpu_custom_call.1} parent=31 // pred_fallthru
          _
      $region32: #{tpu_custom_call.1} parent=5 // pred_fallthru
        _
      %p221 = scmp.le.s32.totalorder 1, %s18
      %p222 = scmp.lt.s32.totalorder %s18, 3
      %p223 = pnand %p221, %p222
      %p224 = pneg %p223
      // Predicated region
      $region37: #{tpu_custom_call.1} parent=5 // pred_check
        _
      $region38: #{tpu_custom_call.1} parent=5 // pred_check_branch
        %226 = sbr.rel (%p223) target = $region40
      $region39: #{tpu_custom_call.1} parent=5 // pred_region
        %s227 = ssub.s32 %s18, 1
        %s228 = smul.u32 8, %s23
        %p229 = scmp.lt.s32.totalorder %s228, 15
        %s230 = scalar_select %p229, %s228, 15
        %s231 = smul.addr %s230, 75
        %s232 = smul.addr %s231, 8
        %s233 = scalar_lea.vmem %s0, %s232
        %p234 = pneg %p44
        %p235 = pneg %p41
        %p236 = pneg %p65
        %p237 = pneg %p62
        %p238 = pneg %p86
        %p239 = pneg %p83
        %p240 = pneg %p107
        %p241 = pneg %p104
        %p242 = pneg %p128
        %p243 = pneg %p125
        %p244 = pneg %p154
        %p245 = pneg %p151
        %s246 = sand.u32 %s141, 1
        %s247 = scalar_lea.sflag [#allocation5], %s246
        %s248 = sand.u32 %s141, 1
        %s249 = smul.addr %s248, 16
        %s250 = scalar_lea.vmem [#allocation4], %s249
        %p251 = pneg %p180
        %p252 = pneg %p177
        %p253 = scmp.lt.s32.totalorder %s23, 1
        %s254 = scalar_select %p253, %s23, 1
        %s255 = smul.addr %s254, 8
        %s256 = scalar_lea.vmem %s6, %s255
        %s257 = smul.u32 8, %s23
        %p258 = scmp.lt.s32.totalorder %s257, 15
        %s259 = scalar_select %p258, %s257, 15
        %s260 = smul.addr %s259, 75
        %s261 = smul.addr %s260, 8
        %s262 = scalar_lea.vmem %s0, %s261
        %s263 = smul.u32 8, %s23
        %p264 = scmp.lt.s32.totalorder %s23, 1
        %s265 = scalar_select %p264, %s23, 1
        %s266 = smul.addr %s265, 8
        %s267 = scalar_lea.vmem %s6, %s266
        %v268 = vld [vmem:[%s262] sm:$0xff]
        %v269 = vld [vmem:[%s262 + $0x8] sm:$0xff]
        %v270 = vld [vmem:[%s262 + $0x10] sm:$0xff]
        %v271 = vld [vmem:[%s262 + $0x18] sm:$0xff]
        %v272 = vld [vmem:[%s262 + $0x20] sm:$0xff]
        %v273 = vld [vmem:[%s262 + $0x28] sm:$0xff]
        %v274 = vld [vmem:[%s262 + $0x30] sm:$0xff]
        %v275 = vld [vmem:[%s262 + $0x38] sm:$0xff]
        %v276 = vld [vmem:[%s262 + $0x40] sm:$0xff]
        %v277 = vld [vmem:[%s262 + $0x48] sm:$0xff]
        %v278 = vld [vmem:[%s262 + $0x50] sm:$0xff]
        %v279 = vld [vmem:[%s262 + $0x58] sm:$0xff]
        %v280 = vld [vmem:[%s262 + $0x60] sm:$0xff]
        %v281 = vld [vmem:[%s262 + $0x68] sm:$0xff]
        %v282 = vld [vmem:[%s262 + $0x70] sm:$0xff]
        %v283 = vld [vmem:[%s262 + $0x78] sm:$0xff]
        %v284 = vld [vmem:[%s262 + $0x80] sm:$0xff]
        %v285 = vld [vmem:[%s262 + $0x88] sm:$0xff]
        %v286 = vld [vmem:[%s262 + $0x90] sm:$0xff]
        %v287 = vld [vmem:[%s262 + $0x98] sm:$0xff]
        %v288 = vld [vmem:[%s262 + $0xa0] sm:$0xff]
        %v289 = vld [vmem:[%s262 + $0xa8] sm:$0xff]
        %v290 = vld [vmem:[%s262 + $0xb0] sm:$0xff]
        %v291 = vld [vmem:[%s262 + $0xb8] sm:$0xff]
        %v292 = vld [vmem:[%s262 + $0xc0] sm:$0xff]
        %v293 = vld [vmem:[%s262 + $0xc8] sm:$0xff]
        %v294 = vld [vmem:[%s262 + $0xd0] sm:$0xff]
        %v295 = vld [vmem:[%s262 + $0xd8] sm:$0xff]
        %v296 = vld [vmem:[%s262 + $0xe0] sm:$0xff]
        %v297 = vld [vmem:[%s262 + $0xe8] sm:$0xff]
        %v298 = vld [vmem:[%s262 + $0xf0] sm:$0xff]
        %v299 = vld [vmem:[%s262 + $0xf8] sm:$0xff]
        %v300 = vld [vmem:[%s262 + $0x100] sm:$0xff]
        %v301 = vld [vmem:[%s262 + $0x108] sm:$0xff]
        %v302 = vld [vmem:[%s262 + $0x110] sm:$0xff]
        %v303 = vld [vmem:[%s262 + $0x118] sm:$0xff]
        %v304 = vld [vmem:[%s262 + $0x120] sm:$0xff]
        %v305 = vld [vmem:[%s262 + $0x128] sm:$0xff]
        %v306 = vld [vmem:[%s262 + $0x130] sm:$0xff]
        %v307 = vld [vmem:[%s262 + $0x138] sm:$0xff]
        %v308 = vld [vmem:[%s262 + $0x140] sm:$0xff]
        %v309 = vld [vmem:[%s262 + $0x148] sm:$0xff]
        %v310 = vld [vmem:[%s262 + $0x150] sm:$0xff]
        %v311 = vld [vmem:[%s262 + $0x158] sm:$0xff]
        %v312 = vld [vmem:[%s262 + $0x160] sm:$0xff]
        %v313 = vld [vmem:[%s262 + $0x168] sm:$0xff]
        %v314 = vld [vmem:[%s262 + $0x170] sm:$0xff]
        %v315 = vld [vmem:[%s262 + $0x178] sm:$0xff]
        %v316 = vld [vmem:[%s262 + $0x180] sm:$0xff]
        %v317 = vld [vmem:[%s262 + $0x188] sm:$0xff]
        %v318 = vld [vmem:[%s262 + $0x190] sm:$0xff]
        %v319 = vld [vmem:[%s262 + $0x198] sm:$0xff]
        %v320 = vld [vmem:[%s262 + $0x1a0] sm:$0xff]
        %v321 = vld [vmem:[%s262 + $0x1a8] sm:$0xff]
        %v322 = vld [vmem:[%s262 + $0x1b0] sm:$0xff]
        %v323 = vld [vmem:[%s262 + $0x1b8] sm:$0xff]
        %v324 = vld [vmem:[%s262 + $0x1c0] sm:$0xff]
        %v325 = vld [vmem:[%s262 + $0x1c8] sm:$0xff]
        %v326 = vld [vmem:[%s262 + $0x1d0] sm:$0xff]
        %v327 = vld [vmem:[%s262 + $0x1d8] sm:$0xff]
        %v328 = vld [vmem:[%s262 + $0x1e0] sm:$0xff]
        %v329 = vld [vmem:[%s262 + $0x1e8] sm:$0xff]
        %v330 = vld [vmem:[%s262 + $0x1f0] sm:$0xff]
        %v331 = vld [vmem:[%s262 + $0x1f8] sm:$0xff]
        %v332 = vld [vmem:[%s262 + $0x200] sm:$0xff]
        %v333 = vld [vmem:[%s262 + $0x208] sm:$0xff]
        %v334 = vld [vmem:[%s262 + $0x210] sm:$0xff]
        %v335 = vld [vmem:[%s262 + $0x218] sm:$0xff]
        %v336 = vld [vmem:[%s262 + $0x220] sm:$0xff]
        %v337 = vld [vmem:[%s262 + $0x228] sm:$0xff]
        %v338 = vld [vmem:[%s262 + $0x230] sm:$0xff]
        %v339 = vld [vmem:[%s262 + $0x238] sm:$0xff]
        %v340 = vld [vmem:[%s262 + $0x240] sm:$0xf]
        %v341 = vld [vmem:[%s262 + $0x248] sm:$0xf]
        %v342 = vld [vmem:[%s262 + $0x250] sm:$0xf]
        %v343 = vld [vmem:[%s262 + $0x258] sm:$0xff]
        %v344 = vld [vmem:[%s262 + $0x260] sm:$0xff]
        %v345 = vld [vmem:[%s262 + $0x268] sm:$0xff]
        %v346 = vld [vmem:[%s262 + $0x270] sm:$0xff]
        %v347 = vld [vmem:[%s262 + $0x278] sm:$0xff]
        %v348 = vld [vmem:[%s262 + $0x280] sm:$0xff]
        %v349 = vld [vmem:[%s262 + $0x288] sm:$0xff]
        %v350 = vld [vmem:[%s262 + $0x290] sm:$0xff]
        %v351 = vld [vmem:[%s262 + $0x298] sm:$0xff]
        %v352 = vld [vmem:[%s262 + $0x2a0] sm:$0xff]
        %v353 = vld [vmem:[%s262 + $0x2a8] sm:$0xff]
        %v354 = vld [vmem:[%s262 + $0x2b0] sm:$0xff]
        %v355 = vld [vmem:[%s262 + $0x2b8] sm:$0xff]
        %v356 = vld [vmem:[%s262 + $0x2c0] sm:$0xff]
        %v357 = vld [vmem:[%s262 + $0x2c8] sm:$0xff]
        %v358 = vld [vmem:[%s262 + $0x2d0] sm:$0xff]
        %v359 = vld [vmem:[%s262 + $0x2d8] sm:$0xff]
        %v360 = vld [vmem:[%s262 + $0x2e0] sm:$0xff]
        %v361 = vld [vmem:[%s262 + $0x2e8] sm:$0xff]
        %v362 = vld [vmem:[%s262 + $0x2f0] sm:$0xff]
        %v363 = vld [vmem:[%s262 + $0x2f8] sm:$0xff]
        %v364 = vld [vmem:[%s262 + $0x300] sm:$0xff]
        %v365 = vld [vmem:[%s262 + $0x308] sm:$0xff]
        %v366 = vld [vmem:[%s262 + $0x310] sm:$0xff]
        %v367 = vld [vmem:[%s262 + $0x318] sm:$0xff]
        %v368 = vld [vmem:[%s262 + $0x320] sm:$0xff]
        %v369 = vld [vmem:[%s262 + $0x328] sm:$0xff]
        %v370 = vld [vmem:[%s262 + $0x330] sm:$0xff]
        %v371 = vld [vmem:[%s262 + $0x338] sm:$0xff]
        %v372 = vld [vmem:[%s262 + $0x340] sm:$0xff]
        %v373 = vld [vmem:[%s262 + $0x348] sm:$0xff]
        %v374 = vld [vmem:[%s262 + $0x350] sm:$0xff]
        %v375 = vld [vmem:[%s262 + $0x358] sm:$0xff]
        %v376 = vld [vmem:[%s262 + $0x360] sm:$0xff]
        %v377 = vld [vmem:[%s262 + $0x368] sm:$0xff]
        %v378 = vld [vmem:[%s262 + $0x370] sm:$0xff]
        %v379 = vld [vmem:[%s262 + $0x378] sm:$0xff]
        %v380 = vld [vmem:[%s262 + $0x380] sm:$0xff]
        %v381 = vld [vmem:[%s262 + $0x388] sm:$0xff]
        %v382 = vld [vmem:[%s262 + $0x390] sm:$0xff]
        %v383 = vld [vmem:[%s262 + $0x398] sm:$0xff]
        %v384 = vld [vmem:[%s262 + $0x3a0] sm:$0xff]
        %v385 = vld [vmem:[%s262 + $0x3a8] sm:$0xff]
        %v386 = vld [vmem:[%s262 + $0x3b0] sm:$0xff]
        %v387 = vld [vmem:[%s262 + $0x3b8] sm:$0xff]
        %v388 = vld [vmem:[%s262 + $0x3c0] sm:$0xff]
        %v389 = vld [vmem:[%s262 + $0x3c8] sm:$0xff]
        %v390 = vld [vmem:[%s262 + $0x3d0] sm:$0xff]
        %v391 = vld [vmem:[%s262 + $0x3d8] sm:$0xff]
        %v392 = vld [vmem:[%s262 + $0x3e0] sm:$0xff]
        %v393 = vld [vmem:[%s262 + $0x3e8] sm:$0xff]
        %v394 = vld [vmem:[%s262 + $0x3f0] sm:$0xff]
        %v395 = vld [vmem:[%s262 + $0x3f8] sm:$0xff]
        %v396 = vld [vmem:[%s262 + $0x400] sm:$0xff]
        %v397 = vld [vmem:[%s262 + $0x408] sm:$0xff]
        %v398 = vld [vmem:[%s262 + $0x410] sm:$0xff]
        %v399 = vld [vmem:[%s262 + $0x418] sm:$0xff]
        %v400 = vld [vmem:[%s262 + $0x420] sm:$0xff]
        %v401 = vld [vmem:[%s262 + $0x428] sm:$0xff]
        %v402 = vld [vmem:[%s262 + $0x430] sm:$0xff]
        %v403 = vld [vmem:[%s262 + $0x438] sm:$0xff]
        %v404 = vld [vmem:[%s262 + $0x440] sm:$0xff]
        %v405 = vld [vmem:[%s262 + $0x448] sm:$0xff]
        %v406 = vld [vmem:[%s262 + $0x450] sm:$0xff]
        %v407 = vld [vmem:[%s262 + $0x458] sm:$0xff]
        %v408 = vld [vmem:[%s262 + $0x460] sm:$0xff]
        %v409 = vld [vmem:[%s262 + $0x468] sm:$0xff]
        %v410 = vld [vmem:[%s262 + $0x470] sm:$0xff]
        %v411 = vld [vmem:[%s262 + $0x478] sm:$0xff]
        %v412 = vld [vmem:[%s262 + $0x480] sm:$0xff]
        %v413 = vld [vmem:[%s262 + $0x488] sm:$0xff]
        %v414 = vld [vmem:[%s262 + $0x490] sm:$0xff]
        %v415 = vld [vmem:[%s262 + $0x498] sm:$0xf]
        %v416 = vld [vmem:[%s262 + $0x4a0] sm:$0xf]
        %v417 = vld [vmem:[%s262 + $0x4a8] sm:$0xf]
        %v418 = vld [vmem:[%s262 + $0x4b0] sm:$0xff]
        %v419 = vld [vmem:[%s262 + $0x4b8] sm:$0xff]
        %v420 = vld [vmem:[%s262 + $0x4c0] sm:$0xff]
        %v421 = vld [vmem:[%s262 + $0x4c8] sm:$0xff]
        %v422 = vld [vmem:[%s262 + $0x4d0] sm:$0xff]
        %v423 = vld [vmem:[%s262 + $0x4d8] sm:$0xff]
        %v424 = vld [vmem:[%s262 + $0x4e0] sm:$0xff]
        %v425 = vld [vmem:[%s262 + $0x4e8] sm:$0xff]
        %v426 = vld [vmem:[%s262 + $0x4f0] sm:$0xff]
        %v427 = vld [vmem:[%s262 + $0x4f8] sm:$0xff]
        %v428 = vld [vmem:[%s262 + $0x500] sm:$0xff]
        %v429 = vld [vmem:[%s262 + $0x508] sm:$0xff]
        %v430 = vld [vmem:[%s262 + $0x510] sm:$0xff]
        %v431 = vld [vmem:[%s262 + $0x518] sm:$0xff]
        %v432 = vld [vmem:[%s262 + $0x520] sm:$0xff]
        %v433 = vld [vmem:[%s262 + $0x528] sm:$0xff]
        %v434 = vld [vmem:[%s262 + $0x530] sm:$0xff]
        %v435 = vld [vmem:[%s262 + $0x538] sm:$0xff]
        %v436 = vld [vmem:[%s262 + $0x540] sm:$0xff]
        %v437 = vld [vmem:[%s262 + $0x548] sm:$0xff]
        %v438 = vld [vmem:[%s262 + $0x550] sm:$0xff]
        %v439 = vld [vmem:[%s262 + $0x558] sm:$0xff]
        %v440 = vld [vmem:[%s262 + $0x560] sm:$0xff]
        %v441 = vld [vmem:[%s262 + $0x568] sm:$0xff]
        %v442 = vld [vmem:[%s262 + $0x570] sm:$0xff]
        %v443 = vld [vmem:[%s262 + $0x578] sm:$0xff]
        %v444 = vld [vmem:[%s262 + $0x580] sm:$0xff]
        %v445 = vld [vmem:[%s262 + $0x588] sm:$0xff]
        %v446 = vld [vmem:[%s262 + $0x590] sm:$0xff]
        %v447 = vld [vmem:[%s262 + $0x598] sm:$0xff]
        %v448 = vld [vmem:[%s262 + $0x5a0] sm:$0xff]
        %v449 = vld [vmem:[%s262 + $0x5a8] sm:$0xff]
        %v450 = vld [vmem:[%s262 + $0x5b0] sm:$0xff]
        %v451 = vld [vmem:[%s262 + $0x5b8] sm:$0xff]
        %v452 = vld [vmem:[%s262 + $0x5c0] sm:$0xff]
        %v453 = vld [vmem:[%s262 + $0x5c8] sm:$0xff]
        %v454 = vld [vmem:[%s262 + $0x5d0] sm:$0xff]
        %v455 = vld [vmem:[%s262 + $0x5d8] sm:$0xff]
        %v456 = vld [vmem:[%s262 + $0x5e0] sm:$0xff]
        %v457 = vld [vmem:[%s262 + $0x5e8] sm:$0xff]
        %v458 = vld [vmem:[%s262 + $0x5f0] sm:$0xff]
        %v459 = vld [vmem:[%s262 + $0x5f8] sm:$0xff]
        %v460 = vld [vmem:[%s262 + $0x600] sm:$0xff]
        %v461 = vld [vmem:[%s262 + $0x608] sm:$0xff]
        %v462 = vld [vmem:[%s262 + $0x610] sm:$0xff]
        %v463 = vld [vmem:[%s262 + $0x618] sm:$0xff]
        %v464 = vld [vmem:[%s262 + $0x620] sm:$0xff]
        %v465 = vld [vmem:[%s262 + $0x628] sm:$0xff]
        %v466 = vld [vmem:[%s262 + $0x630] sm:$0xff]
        %v467 = vld [vmem:[%s262 + $0x638] sm:$0xff]
        %v468 = vld [vmem:[%s262 + $0x640] sm:$0xff]
        %v469 = vld [vmem:[%s262 + $0x648] sm:$0xff]
        %v470 = vld [vmem:[%s262 + $0x650] sm:$0xff]
        %v471 = vld [vmem:[%s262 + $0x658] sm:$0xff]
        %v472 = vld [vmem:[%s262 + $0x660] sm:$0xff]
        %v473 = vld [vmem:[%s262 + $0x668] sm:$0xff]
        %v474 = vld [vmem:[%s262 + $0x670] sm:$0xff]
        %v475 = vld [vmem:[%s262 + $0x678] sm:$0xff]
        %v476 = vld [vmem:[%s262 + $0x680] sm:$0xff]
        %v477 = vld [vmem:[%s262 + $0x688] sm:$0xff]
        %v478 = vld [vmem:[%s262 + $0x690] sm:$0xff]
        %v479 = vld [vmem:[%s262 + $0x698] sm:$0xff]
        %v480 = vld [vmem:[%s262 + $0x6a0] sm:$0xff]
        %v481 = vld [vmem:[%s262 + $0x6a8] sm:$0xff]
        %v482 = vld [vmem:[%s262 + $0x6b0] sm:$0xff]
        %v483 = vld [vmem:[%s262 + $0x6b8] sm:$0xff]
        %v484 = vld [vmem:[%s262 + $0x6c0] sm:$0xff]
        %v485 = vld [vmem:[%s262 + $0x6c8] sm:$0xff]
        %v486 = vld [vmem:[%s262 + $0x6d0] sm:$0xff]
        %v487 = vld [vmem:[%s262 + $0x6d8] sm:$0xff]
        %v488 = vld [vmem:[%s262 + $0x6e0] sm:$0xff]
        %v489 = vld [vmem:[%s262 + $0x6e8] sm:$0xff]
        %v490 = vld [vmem:[%s262 + $0x6f0] sm:$0xf]
        %v491 = vld [vmem:[%s262 + $0x6f8] sm:$0xf]
        %v492 = vld [vmem:[%s262 + $0x700] sm:$0xf]
        %v493 = vld [vmem:[%s262 + $0x708] sm:$0xff]
        %v494 = vld [vmem:[%s262 + $0x710] sm:$0xff]
        %v495 = vld [vmem:[%s262 + $0x718] sm:$0xff]
        %v496 = vld [vmem:[%s262 + $0x720] sm:$0xff]
        %v497 = vld [vmem:[%s262 + $0x728] sm:$0xff]
        %v498 = vld [vmem:[%s262 + $0x730] sm:$0xff]
        %v499 = vld [vmem:[%s262 + $0x738] sm:$0xff]
        %v500 = vld [vmem:[%s262 + $0x740] sm:$0xff]
        %v501 = vld [vmem:[%s262 + $0x748] sm:$0xff]
        %v502 = vld [vmem:[%s262 + $0x750] sm:$0xff]
        %v503 = vld [vmem:[%s262 + $0x758] sm:$0xff]
        %v504 = vld [vmem:[%s262 + $0x760] sm:$0xff]
        %v505 = vld [vmem:[%s262 + $0x768] sm:$0xff]
        %v506 = vld [vmem:[%s262 + $0x770] sm:$0xff]
        %v507 = vld [vmem:[%s262 + $0x778] sm:$0xff]
        %v508 = vld [vmem:[%s262 + $0x780] sm:$0xff]
        %v509 = vld [vmem:[%s262 + $0x788] sm:$0xff]
        %v510 = vld [vmem:[%s262 + $0x790] sm:$0xff]
        %v511 = vld [vmem:[%s262 + $0x798] sm:$0xff]
        %v512 = vld [vmem:[%s262 + $0x7a0] sm:$0xff]
        %v513 = vld [vmem:[%s262 + $0x7a8] sm:$0xff]
        %v514 = vld [vmem:[%s262 + $0x7b0] sm:$0xff]
        %v515 = vld [vmem:[%s262 + $0x7b8] sm:$0xff]
        %v516 = vld [vmem:[%s262 + $0x7c0] sm:$0xff]
        %v517 = vld [vmem:[%s262 + $0x7c8] sm:$0xff]
        %v518 = vld [vmem:[%s262 + $0x7d0] sm:$0xff]
        %v519 = vld [vmem:[%s262 + $0x7d8] sm:$0xff]
        %v520 = vld [vmem:[%s262 + $0x7e0] sm:$0xff]
        %v521 = vld [vmem:[%s262 + $0x7e8] sm:$0xff]
        %v522 = vld [vmem:[%s262 + $0x7f0] sm:$0xff]
        %v523 = vld [vmem:[%s262 + $0x7f8] sm:$0xff]
        %v524 = vld [vmem:[%s262 + $0x800] sm:$0xff]
        %v525 = vld [vmem:[%s262 + $0x808] sm:$0xff]
        %v526 = vld [vmem:[%s262 + $0x810] sm:$0xff]
        %v527 = vld [vmem:[%s262 + $0x818] sm:$0xff]
        %v528 = vld [vmem:[%s262 + $0x820] sm:$0xff]
        %v529 = vld [vmem:[%s262 + $0x828] sm:$0xff]
        %v530 = vld [vmem:[%s262 + $0x830] sm:$0xff]
        %v531 = vld [vmem:[%s262 + $0x838] sm:$0xff]
        %v532 = vld [vmem:[%s262 + $0x840] sm:$0xff]
        %v533 = vld [vmem:[%s262 + $0x848] sm:$0xff]
        %v534 = vld [vmem:[%s262 + $0x850] sm:$0xff]
        %v535 = vld [vmem:[%s262 + $0x858] sm:$0xff]
        %v536 = vld [vmem:[%s262 + $0x860] sm:$0xff]
        %v537 = vld [vmem:[%s262 + $0x868] sm:$0xff]
        %v538 = vld [vmem:[%s262 + $0x870] sm:$0xff]
        %v539 = vld [vmem:[%s262 + $0x878] sm:$0xff]
        %v540 = vld [vmem:[%s262 + $0x880] sm:$0xff]
        %v541 = vld [vmem:[%s262 + $0x888] sm:$0xff]
        %v542 = vld [vmem:[%s262 + $0x890] sm:$0xff]
        %v543 = vld [vmem:[%s262 + $0x898] sm:$0xff]
        %v544 = vld [vmem:[%s262 + $0x8a0] sm:$0xff]
        %v545 = vld [vmem:[%s262 + $0x8a8] sm:$0xff]
        %v546 = vld [vmem:[%s262 + $0x8b0] sm:$0xff]
        %v547 = vld [vmem:[%s262 + $0x8b8] sm:$0xff]
        %v548 = vld [vmem:[%s262 + $0x8c0] sm:$0xff]
        %v549 = vld [vmem:[%s262 + $0x8c8] sm:$0xff]
        %v550 = vld [vmem:[%s262 + $0x8d0] sm:$0xff]
        %v551 = vld [vmem:[%s262 + $0x8d8] sm:$0xff]
        %v552 = vld [vmem:[%s262 + $0x8e0] sm:$0xff]
        %v553 = vld [vmem:[%s262 + $0x8e8] sm:$0xff]
        %v554 = vld [vmem:[%s262 + $0x8f0] sm:$0xff]
        %v555 = vld [vmem:[%s262 + $0x8f8] sm:$0xff]
        %v556 = vld [vmem:[%s262 + $0x900] sm:$0xff]
        %v557 = vld [vmem:[%s262 + $0x908] sm:$0xff]
        %v558 = vld [vmem:[%s262 + $0x910] sm:$0xff]
        %v559 = vld [vmem:[%s262 + $0x918] sm:$0xff]
        %v560 = vld [vmem:[%s262 + $0x920] sm:$0xff]
        %v561 = vld [vmem:[%s262 + $0x928] sm:$0xff]
        %v562 = vld [vmem:[%s262 + $0x930] sm:$0xff]
        %v563 = vld [vmem:[%s262 + $0x938] sm:$0xff]
        %v564 = vld [vmem:[%s262 + $0x940] sm:$0xff]
        %v565 = vld [vmem:[%s262 + $0x948] sm:$0xf]
        %v566 = vld [vmem:[%s262 + $0x950] sm:$0xf]
        %v567 = vld [vmem:[%s262 + $0x958] sm:$0xf]
        %v568 = vld [vmem:[%s262 + $0x960] sm:$0xff]
        %v569 = vld [vmem:[%s262 + $0x968] sm:$0xff]
        %v570 = vld [vmem:[%s262 + $0x970] sm:$0xff]
        %v571 = vld [vmem:[%s262 + $0x978] sm:$0xff]
        %v572 = vld [vmem:[%s262 + $0x980] sm:$0xff]
        %v573 = vld [vmem:[%s262 + $0x988] sm:$0xff]
        %v574 = vld [vmem:[%s262 + $0x990] sm:$0xff]
        %v575 = vld [vmem:[%s262 + $0x998] sm:$0xff]
        %v576 = vld [vmem:[%s262 + $0x9a0] sm:$0xff]
        %v577 = vld [vmem:[%s262 + $0x9a8] sm:$0xff]
        %v578 = vld [vmem:[%s262 + $0x9b0] sm:$0xff]
        %v579 = vld [vmem:[%s262 + $0x9b8] sm:$0xff]
        %v580 = vld [vmem:[%s262 + $0x9c0] sm:$0xff]
        %v581 = vld [vmem:[%s262 + $0x9c8] sm:$0xff]
        %v582 = vld [vmem:[%s262 + $0x9d0] sm:$0xff]
        %v583 = vld [vmem:[%s262 + $0x9d8] sm:$0xff]
        %v584 = vld [vmem:[%s262 + $0x9e0] sm:$0xff]
        %v585 = vld [vmem:[%s262 + $0x9e8] sm:$0xff]
        %v586 = vld [vmem:[%s262 + $0x9f0] sm:$0xff]
        %v587 = vld [vmem:[%s262 + $0x9f8] sm:$0xff]
        %v588 = vld [vmem:[%s262 + $0xa00] sm:$0xff]
        %v589 = vld [vmem:[%s262 + $0xa08] sm:$0xff]
        %v590 = vld [vmem:[%s262 + $0xa10] sm:$0xff]
        %v591 = vld [vmem:[%s262 + $0xa18] sm:$0xff]
        %v592 = vld [vmem:[%s262 + $0xa20] sm:$0xff]
        %v593 = vld [vmem:[%s262 + $0xa28] sm:$0xff]
        %v594 = vld [vmem:[%s262 + $0xa30] sm:$0xff]
        %v595 = vld [vmem:[%s262 + $0xa38] sm:$0xff]
        %v596 = vld [vmem:[%s262 + $0xa40] sm:$0xff]
        %v597 = vld [vmem:[%s262 + $0xa48] sm:$0xff]
        %v598 = vld [vmem:[%s262 + $0xa50] sm:$0xff]
        %v599 = vld [vmem:[%s262 + $0xa58] sm:$0xff]
        %v600 = vld [vmem:[%s262 + $0xa60] sm:$0xff]
        %v601 = vld [vmem:[%s262 + $0xa68] sm:$0xff]
        %v602 = vld [vmem:[%s262 + $0xa70] sm:$0xff]
        %v603 = vld [vmem:[%s262 + $0xa78] sm:$0xff]
        %v604 = vld [vmem:[%s262 + $0xa80] sm:$0xff]
        %v605 = vld [vmem:[%s262 + $0xa88] sm:$0xff]
        %v606 = vld [vmem:[%s262 + $0xa90] sm:$0xff]
        %v607 = vld [vmem:[%s262 + $0xa98] sm:$0xff]
        %v608 = vld [vmem:[%s262 + $0xaa0] sm:$0xff]
        %v609 = vld [vmem:[%s262 + $0xaa8] sm:$0xff]
        %v610 = vld [vmem:[%s262 + $0xab0] sm:$0xff]
        %v611 = vld [vmem:[%s262 + $0xab8] sm:$0xff]
        %v612 = vld [vmem:[%s262 + $0xac0] sm:$0xff]
        %v613 = vld [vmem:[%s262 + $0xac8] sm:$0xff]
        %v614 = vld [vmem:[%s262 + $0xad0] sm:$0xff]
        %v615 = vld [vmem:[%s262 + $0xad8] sm:$0xff]
        %v616 = vld [vmem:[%s262 + $0xae0] sm:$0xff]
        %v617 = vld [vmem:[%s262 + $0xae8] sm:$0xff]
        %v618 = vld [vmem:[%s262 + $0xaf0] sm:$0xff]
        %v619 = vld [vmem:[%s262 + $0xaf8] sm:$0xff]
        %v620 = vld [vmem:[%s262 + $0xb00] sm:$0xff]
        %v621 = vld [vmem:[%s262 + $0xb08] sm:$0xff]
        %v622 = vld [vmem:[%s262 + $0xb10] sm:$0xff]
        %v623 = vld [vmem:[%s262 + $0xb18] sm:$0xff]
        %v624 = vld [vmem:[%s262 + $0xb20] sm:$0xff]
        %v625 = vld [vmem:[%s262 + $0xb28] sm:$0xff]
        %v626 = vld [vmem:[%s262 + $0xb30] sm:$0xff]
        %v627 = vld [vmem:[%s262 + $0xb38] sm:$0xff]
        %v628 = vld [vmem:[%s262 + $0xb40] sm:$0xff]
        %v629 = vld [vmem:[%s262 + $0xb48] sm:$0xff]
        %v630 = vld [vmem:[%s262 + $0xb50] sm:$0xff]
        %v631 = vld [vmem:[%s262 + $0xb58] sm:$0xff]
        %v632 = vld [vmem:[%s262 + $0xb60] sm:$0xff]
        %v633 = vld [vmem:[%s262 + $0xb68] sm:$0xff]
        %v634 = vld [vmem:[%s262 + $0xb70] sm:$0xff]
        %v635 = vld [vmem:[%s262 + $0xb78] sm:$0xff]
        %v636 = vld [vmem:[%s262 + $0xb80] sm:$0xff]
        %v637 = vld [vmem:[%s262 + $0xb88] sm:$0xff]
        %v638 = vld [vmem:[%s262 + $0xb90] sm:$0xff]
        %v639 = vld [vmem:[%s262 + $0xb98] sm:$0xff]
        %v640 = vld [vmem:[%s262 + $0xba0] sm:$0xf]
        %v641 = vld [vmem:[%s262 + $0xba8] sm:$0xf]
        %v642 = vld [vmem:[%s262 + $0xbb0] sm:$0xf]
        %v643 = vld [vmem:[%s262 + $0xbb8] sm:$0xff]
        %v644 = vld [vmem:[%s262 + $0xbc0] sm:$0xff]
        %v645 = vld [vmem:[%s262 + $0xbc8] sm:$0xff]
        %v646 = vld [vmem:[%s262 + $0xbd0] sm:$0xff]
        %v647 = vld [vmem:[%s262 + $0xbd8] sm:$0xff]
        %v648 = vld [vmem:[%s262 + $0xbe0] sm:$0xff]
        %v649 = vld [vmem:[%s262 + $0xbe8] sm:$0xff]
        %v650 = vld [vmem:[%s262 + $0xbf0] sm:$0xff]
        %v651 = vld [vmem:[%s262 + $0xbf8] sm:$0xff]
        %v652 = vld [vmem:[%s262 + $0xc00] sm:$0xff]
        %v653 = vld [vmem:[%s262 + $0xc08] sm:$0xff]
        %v654 = vld [vmem:[%s262 + $0xc10] sm:$0xff]
        %v655 = vld [vmem:[%s262 + $0xc18] sm:$0xff]
        %v656 = vld [vmem:[%s262 + $0xc20] sm:$0xff]
        %v657 = vld [vmem:[%s262 + $0xc28] sm:$0xff]
        %v658 = vld [vmem:[%s262 + $0xc30] sm:$0xff]
        %v659 = vld [vmem:[%s262 + $0xc38] sm:$0xff]
        %v660 = vld [vmem:[%s262 + $0xc40] sm:$0xff]
        %v661 = vld [vmem:[%s262 + $0xc48] sm:$0xff]
        %v662 = vld [vmem:[%s262 + $0xc50] sm:$0xff]
        %v663 = vld [vmem:[%s262 + $0xc58] sm:$0xff]
        %v664 = vld [vmem:[%s262 + $0xc60] sm:$0xff]
        %v665 = vld [vmem:[%s262 + $0xc68] sm:$0xff]
        %v666 = vld [vmem:[%s262 + $0xc70] sm:$0xff]
        %v667 = vld [vmem:[%s262 + $0xc78] sm:$0xff]
        %v668 = vld [vmem:[%s262 + $0xc80] sm:$0xff]
        %v669 = vld [vmem:[%s262 + $0xc88] sm:$0xff]
        %v670 = vld [vmem:[%s262 + $0xc90] sm:$0xff]
        %v671 = vld [vmem:[%s262 + $0xc98] sm:$0xff]
        %v672 = vld [vmem:[%s262 + $0xca0] sm:$0xff]
        %v673 = vld [vmem:[%s262 + $0xca8] sm:$0xff]
        %v674 = vld [vmem:[%s262 + $0xcb0] sm:$0xff]
        %v675 = vld [vmem:[%s262 + $0xcb8] sm:$0xff]
        %v676 = vld [vmem:[%s262 + $0xcc0] sm:$0xff]
        %v677 = vld [vmem:[%s262 + $0xcc8] sm:$0xff]
        %v678 = vld [vmem:[%s262 + $0xcd0] sm:$0xff]
        %v679 = vld [vmem:[%s262 + $0xcd8] sm:$0xff]
        %v680 = vld [vmem:[%s262 + $0xce0] sm:$0xff]
        %v681 = vld [vmem:[%s262 + $0xce8] sm:$0xff]
        %v682 = vld [vmem:[%s262 + $0xcf0] sm:$0xff]
        %v683 = vld [vmem:[%s262 + $0xcf8] sm:$0xff]
        %v684 = vld [vmem:[%s262 + $0xd00] sm:$0xff]
        %v685 = vld [vmem:[%s262 + $0xd08] sm:$0xff]
        %v686 = vld [vmem:[%s262 + $0xd10] sm:$0xff]
        %v687 = vld [vmem:[%s262 + $0xd18] sm:$0xff]
        %v688 = vld [vmem:[%s262 + $0xd20] sm:$0xff]
        %v689 = vld [vmem:[%s262 + $0xd28] sm:$0xff]
        %v690 = vld [vmem:[%s262 + $0xd30] sm:$0xff]
        %v691 = vld [vmem:[%s262 + $0xd38] sm:$0xff]
        %v692 = vld [vmem:[%s262 + $0xd40] sm:$0xff]
        %v693 = vld [vmem:[%s262 + $0xd48] sm:$0xff]
        %v694 = vld [vmem:[%s262 + $0xd50] sm:$0xff]
        %v695 = vld [vmem:[%s262 + $0xd58] sm:$0xff]
        %v696 = vld [vmem:[%s262 + $0xd60] sm:$0xff]
        %v697 = vld [vmem:[%s262 + $0xd68] sm:$0xff]
        %v698 = vld [vmem:[%s262 + $0xd70] sm:$0xff]
        %v699 = vld [vmem:[%s262 + $0xd78] sm:$0xff]
        %v700 = vld [vmem:[%s262 + $0xd80] sm:$0xff]
        %v701 = vld [vmem:[%s262 + $0xd88] sm:$0xff]
        %v702 = vld [vmem:[%s262 + $0xd90] sm:$0xff]
        %v703 = vld [vmem:[%s262 + $0xd98] sm:$0xff]
        %v704 = vld [vmem:[%s262 + $0xda0] sm:$0xff]
        %v705 = vld [vmem:[%s262 + $0xda8] sm:$0xff]
        %v706 = vld [vmem:[%s262 + $0xdb0] sm:$0xff]
        %v707 = vld [vmem:[%s262 + $0xdb8] sm:$0xff]
        %v708 = vld [vmem:[%s262 + $0xdc0] sm:$0xff]
        %v709 = vld [vmem:[%s262 + $0xdc8] sm:$0xff]
        %v710 = vld [vmem:[%s262 + $0xdd0] sm:$0xff]
        %v711 = vld [vmem:[%s262 + $0xdd8] sm:$0xff]
        %v712 = vld [vmem:[%s262 + $0xde0] sm:$0xff]
        %v713 = vld [vmem:[%s262 + $0xde8] sm:$0xff]
        %v714 = vld [vmem:[%s262 + $0xdf0] sm:$0xff]
        %v715 = vld [vmem:[%s262 + $0xdf8] sm:$0xf]
        %v716 = vld [vmem:[%s262 + $0xe00] sm:$0xf]
        %v717 = vld [vmem:[%s262 + $0xe08] sm:$0xf]
        %v718 = vld [vmem:[%s262 + $0xe10] sm:$0xff]
        %v719 = vld [vmem:[%s262 + $0xe18] sm:$0xff]
        %v720 = vld [vmem:[%s262 + $0xe20] sm:$0xff]
        %v721 = vld [vmem:[%s262 + $0xe28] sm:$0xff]
        %v722 = vld [vmem:[%s262 + $0xe30] sm:$0xff]
        %v723 = vld [vmem:[%s262 + $0xe38] sm:$0xff]
        %v724 = vld [vmem:[%s262 + $0xe40] sm:$0xff]
        %v725 = vld [vmem:[%s262 + $0xe48] sm:$0xff]
        %v726 = vld [vmem:[%s262 + $0xe50] sm:$0xff]
        %v727 = vld [vmem:[%s262 + $0xe58] sm:$0xff]
        %v728 = vld [vmem:[%s262 + $0xe60] sm:$0xff]
        %v729 = vld [vmem:[%s262 + $0xe68] sm:$0xff]
        %v730 = vld [vmem:[%s262 + $0xe70] sm:$0xff]
        %v731 = vld [vmem:[%s262 + $0xe78] sm:$0xff]
        %v732 = vld [vmem:[%s262 + $0xe80] sm:$0xff]
        %v733 = vld [vmem:[%s262 + $0xe88] sm:$0xff]
        %v734 = vld [vmem:[%s262 + $0xe90] sm:$0xff]
        %v735 = vld [vmem:[%s262 + $0xe98] sm:$0xff]
        %v736 = vld [vmem:[%s262 + $0xea0] sm:$0xff]
        %v737 = vld [vmem:[%s262 + $0xea8] sm:$0xff]
        %v738 = vld [vmem:[%s262 + $0xeb0] sm:$0xff]
        %v739 = vld [vmem:[%s262 + $0xeb8] sm:$0xff]
        %v740 = vld [vmem:[%s262 + $0xec0] sm:$0xff]
        %v741 = vld [vmem:[%s262 + $0xec8] sm:$0xff]
        %v742 = vld [vmem:[%s262 + $0xed0] sm:$0xff]
        %v743 = vld [vmem:[%s262 + $0xed8] sm:$0xff]
        %v744 = vld [vmem:[%s262 + $0xee0] sm:$0xff]
        %v745 = vld [vmem:[%s262 + $0xee8] sm:$0xff]
        %v746 = vld [vmem:[%s262 + $0xef0] sm:$0xff]
        %v747 = vld [vmem:[%s262 + $0xef8] sm:$0xff]
        %v748 = vld [vmem:[%s262 + $0xf00] sm:$0xff]
        %v749 = vld [vmem:[%s262 + $0xf08] sm:$0xff]
        %v750 = vld [vmem:[%s262 + $0xf10] sm:$0xff]
        %v751 = vld [vmem:[%s262 + $0xf18] sm:$0xff]
        %v752 = vld [vmem:[%s262 + $0xf20] sm:$0xff]
        %v753 = vld [vmem:[%s262 + $0xf28] sm:$0xff]
        %v754 = vld [vmem:[%s262 + $0xf30] sm:$0xff]
        %v755 = vld [vmem:[%s262 + $0xf38] sm:$0xff]
        %v756 = vld [vmem:[%s262 + $0xf40] sm:$0xff]
        %v757 = vld [vmem:[%s262 + $0xf48] sm:$0xff]
        %v758 = vld [vmem:[%s262 + $0xf50] sm:$0xff]
        %v759 = vld [vmem:[%s262 + $0xf58] sm:$0xff]
        %v760 = vld [vmem:[%s262 + $0xf60] sm:$0xff]
        %v761 = vld [vmem:[%s262 + $0xf68] sm:$0xff]
        %v762 = vld [vmem:[%s262 + $0xf70] sm:$0xff]
        %v763 = vld [vmem:[%s262 + $0xf78] sm:$0xff]
        %v764 = vld [vmem:[%s262 + $0xf80] sm:$0xff]
        %v765 = vld [vmem:[%s262 + $0xf88] sm:$0xff]
        %v766 = vld [vmem:[%s262 + $0xf90] sm:$0xff]
        %v767 = vld [vmem:[%s262 + $0xf98] sm:$0xff]
        %v768 = vld [vmem:[%s262 + $0xfa0] sm:$0xff]
        %v769 = vld [vmem:[%s262 + $0xfa8] sm:$0xff]
        %v770 = vld [vmem:[%s262 + $0xfb0] sm:$0xff]
        %v771 = vld [vmem:[%s262 + $0xfb8] sm:$0xff]
        %v772 = vld [vmem:[%s262 + $0xfc0] sm:$0xff]
        %v773 = vld [vmem:[%s262 + $0xfc8] sm:$0xff]
        %v774 = vld [vmem:[%s262 + $0xfd0] sm:$0xff]
        %v775 = vld [vmem:[%s262 + $0xfd8] sm:$0xff]
        %v776 = vld [vmem:[%s262 + $0xfe0] sm:$0xff]
        %v777 = vld [vmem:[%s262 + $0xfe8] sm:$0xff]
        %v778 = vld [vmem:[%s262 + $0xff0] sm:$0xff]
        %v779 = vld [vmem:[%s262 + $0xff8] sm:$0xff]
        %v780 = vld [vmem:[%s262 + $0x1000] sm:$0xff]
        %v781 = vld [vmem:[%s262 + $0x1008] sm:$0xff]
        %v782 = vld [vmem:[%s262 + $0x1010] sm:$0xff]
        %v783 = vld [vmem:[%s262 + $0x1018] sm:$0xff]
        %v784 = vld [vmem:[%s262 + $0x1020] sm:$0xff]
        %v785 = vld [vmem:[%s262 + $0x1028] sm:$0xff]
        %v786 = vld [vmem:[%s262 + $0x1030] sm:$0xff]
        %v787 = vld [vmem:[%s262 + $0x1038] sm:$0xff]
        %v788 = vld [vmem:[%s262 + $0x1040] sm:$0xff]
        %v789 = vld [vmem:[%s262 + $0x1048] sm:$0xff]
        %v790 = vld [vmem:[%s262 + $0x1050] sm:$0xf]
        %v791 = vld [vmem:[%s262 + $0x1058] sm:$0xf]
        %v792 = vld [vmem:[%s262 + $0x1060] sm:$0xf]
        %v793 = vld [vmem:[%s262 + $0x1068] sm:$0xff]
        %v794 = vld [vmem:[%s262 + $0x1070] sm:$0xff]
        %v795 = vld [vmem:[%s262 + $0x1078] sm:$0xff]
        %v796 = vld [vmem:[%s262 + $0x1080] sm:$0xff]
        %v797 = vld [vmem:[%s262 + $0x1088] sm:$0xff]
        %v798 = vld [vmem:[%s262 + $0x1090] sm:$0xff]
        %v799 = vld [vmem:[%s262 + $0x1098] sm:$0xff]
        %v800 = vld [vmem:[%s262 + $0x10a0] sm:$0xff]
        %v801 = vld [vmem:[%s262 + $0x10a8] sm:$0xff]
        %v802 = vld [vmem:[%s262 + $0x10b0] sm:$0xff]
        %v803 = vld [vmem:[%s262 + $0x10b8] sm:$0xff]
        %v804 = vld [vmem:[%s262 + $0x10c0] sm:$0xff]
        %v805 = vld [vmem:[%s262 + $0x10c8] sm:$0xff]
        %v806 = vld [vmem:[%s262 + $0x10d0] sm:$0xff]
        %v807 = vld [vmem:[%s262 + $0x10d8] sm:$0xff]
        %v808 = vld [vmem:[%s262 + $0x10e0] sm:$0xff]
        %v809 = vld [vmem:[%s262 + $0x10e8] sm:$0xff]
        %v810 = vld [vmem:[%s262 + $0x10f0] sm:$0xff]
        %v811 = vld [vmem:[%s262 + $0x10f8] sm:$0xff]
        %v812 = vld [vmem:[%s262 + $0x1100] sm:$0xff]
        %v813 = vld [vmem:[%s262 + $0x1108] sm:$0xff]
        %v814 = vld [vmem:[%s262 + $0x1110] sm:$0xff]
        %v815 = vld [vmem:[%s262 + $0x1118] sm:$0xff]
        %v816 = vld [vmem:[%s262 + $0x1120] sm:$0xff]
        %v817 = vld [vmem:[%s262 + $0x1128] sm:$0xff]
        %v818 = vld [vmem:[%s262 + $0x1130] sm:$0xff]
        %v819 = vld [vmem:[%s262 + $0x1138] sm:$0xff]
        %v820 = vld [vmem:[%s262 + $0x1140] sm:$0xff]
        %v821 = vld [vmem:[%s262 + $0x1148] sm:$0xff]
        %v822 = vld [vmem:[%s262 + $0x1150] sm:$0xff]
        %v823 = vld [vmem:[%s262 + $0x1158] sm:$0xff]
        %v824 = vld [vmem:[%s262 + $0x1160] sm:$0xff]
        %v825 = vld [vmem:[%s262 + $0x1168] sm:$0xff]
        %v826 = vld [vmem:[%s262 + $0x1170] sm:$0xff]
        %v827 = vld [vmem:[%s262 + $0x1178] sm:$0xff]
        %v828 = vld [vmem:[%s262 + $0x1180] sm:$0xff]
        %v829 = vld [vmem:[%s262 + $0x1188] sm:$0xff]
        %v830 = vld [vmem:[%s262 + $0x1190] sm:$0xff]
        %v831 = vld [vmem:[%s262 + $0x1198] sm:$0xff]
        %v832 = vld [vmem:[%s262 + $0x11a0] sm:$0xff]
        %v833 = vld [vmem:[%s262 + $0x11a8] sm:$0xff]
        %v834 = vld [vmem:[%s262 + $0x11b0] sm:$0xff]
        %v835 = vld [vmem:[%s262 + $0x11b8] sm:$0xff]
        %v836 = vld [vmem:[%s262 + $0x11c0] sm:$0xff]
        %v837 = vld [vmem:[%s262 + $0x11c8] sm:$0xff]
        %v838 = vld [vmem:[%s262 + $0x11d0] sm:$0xff]
        %v839 = vld [vmem:[%s262 + $0x11d8] sm:$0xff]
        %v840 = vld [vmem:[%s262 + $0x11e0] sm:$0xff]
        %v841 = vld [vmem:[%s262 + $0x11e8] sm:$0xff]
        %v842 = vld [vmem:[%s262 + $0x11f0] sm:$0xff]
        %v843 = vld [vmem:[%s262 + $0x11f8] sm:$0xff]
        %v844 = vld [vmem:[%s262 + $0x1200] sm:$0xff]
        %v845 = vld [vmem:[%s262 + $0x1208] sm:$0xff]
        %v846 = vld [vmem:[%s262 + $0x1210] sm:$0xff]
        %v847 = vld [vmem:[%s262 + $0x1218] sm:$0xff]
        %v848 = vld [vmem:[%s262 + $0x1220] sm:$0xff]
        %v849 = vld [vmem:[%s262 + $0x1228] sm:$0xff]
        %v850 = vld [vmem:[%s262 + $0x1230] sm:$0xff]
        %v851 = vld [vmem:[%s262 + $0x1238] sm:$0xff]
        %v852 = vld [vmem:[%s262 + $0x1240] sm:$0xff]
        %v853 = vld [vmem:[%s262 + $0x1248] sm:$0xff]
        %v854 = vld [vmem:[%s262 + $0x1250] sm:$0xff]
        %v855 = vld [vmem:[%s262 + $0x1258] sm:$0xff]
        %v856 = vld [vmem:[%s262 + $0x1260] sm:$0xff]
        %v857 = vld [vmem:[%s262 + $0x1268] sm:$0xff]
        %v858 = vld [vmem:[%s262 + $0x1270] sm:$0xff]
        %v859 = vld [vmem:[%s262 + $0x1278] sm:$0xff]
        %v860 = vld [vmem:[%s262 + $0x1280] sm:$0xff]
        %v861 = vld [vmem:[%s262 + $0x1288] sm:$0xff]
        %v862 = vld [vmem:[%s262 + $0x1290] sm:$0xff]
        %v863 = vld [vmem:[%s262 + $0x1298] sm:$0xff]
        %v864 = vld [vmem:[%s262 + $0x12a0] sm:$0xff]
        %v865 = vld [vmem:[%s262 + $0x12a8] sm:$0xf]
        %v866 = vld [vmem:[%s262 + $0x12b0] sm:$0xf]
        %v867 = vld [vmem:[%s262 + $0x12b8] sm:$0xf]
        %v868 = vld [vmem:[%s1] sm:$0x7]
        %v870 = vlaneseq
        %v871 = vshrl.u32 %v870, 7
        %v872 = vsub.s32 0, %v871
        %v873 = vrot.slane %v868, %v872
        %v874 = vlaneseq
        %v875 = vshrl.u32 %v874, 7
        %v876 = vsub.s32 1, %v875
        %v877 = vrot.slane %v868, %v876
        %v878 = vlaneseq
        %v879 = vshrl.u32 %v878, 7
        %v880 = vsub.s32 2, %v879
        %v881 = vrot.slane %v868, %v880
        %885 = vmatprep.subr.mxu0 %v269
        %886 = vmatpush1.xpose.msra.mxu0 %v268
        %887 = vmatprep.subr.mxu0 %v272
        %888 = vmatpush1.xpose.msra.mxu0 %v271
        %889 = vmatprep.subr.mxu0 %v275
        %890 = vmatpush1.xpose.msra.mxu0 %v274
        %891 = vmatprep.subr.mxu0 %v278
        %892 = vmatpush1.xpose.msra.mxu0 %v277
        %893 = vmatprep.subr.mxu0 %v281
        %894 = vmatpush1.xpose.msra.mxu0 %v280
        %895 = vmatprep.subr.mxu0 %v284
        %896 = vmatpush1.xpose.msra.mxu0 %v283
        %897 = vmatprep.subr.mxu0 %v287
        %898 = vmatpush1.xpose.msra.mxu0 %v286
        %899 = vmatprep.subr.mxu0 %v290
        %900 = vmatpush1.xpose.msra.mxu0 %v289
        %901 = vmatprep.subr.mxu0 %v293
        %902 = vmatpush1.xpose.msra.mxu0 %v292
        %903 = vmatprep.subr.mxu0 %v296
        %904 = vmatpush1.xpose.msra.mxu0 %v295
        %905 = vmatprep.subr.mxu0 %v299
        %906 = vmatpush1.xpose.msra.mxu0 %v298
        %907 = vmatprep.subr.mxu0 %v302
        %908 = vmatpush1.xpose.msra.mxu0 %v301
        %909 = vmatprep.subr.mxu0 %v305
        %910 = vmatpush1.xpose.msra.mxu0 %v304
        %911 = vmatprep.subr.mxu0 %v308
        %912 = vmatpush1.xpose.msra.mxu0 %v307
        %913 = vmatprep.subr.mxu0 %v311
        %914 = vmatpush1.xpose.msra.mxu0 %v310
        %915 = vmatprep.subr.mxu0 %v314
        %916 = vmatpush1.xpose.msra.mxu0 %v313
        %917 = vmatprep.subr.mxu0 %v317
        %918 = vmatpush1.xpose.msra.mxu0 %v316
        %919 = vmatprep.subr.mxu0 %v320
        %920 = vmatpush1.xpose.msra.mxu0 %v319
        %921 = vmatprep.subr.mxu0 %v323
        %922 = vmatpush1.xpose.msra.mxu0 %v322
        %923 = vmatprep.subr.mxu0 %v326
        %924 = vmatpush1.xpose.msra.mxu0 %v325
        %925 = vmatprep.subr.mxu0 %v329
        %926 = vmatpush1.xpose.msra.mxu0 %v328
        %927 = vmatprep.subr.mxu0 %v332
        %928 = vmatpush1.xpose.msra.mxu0 %v331
        %929 = vmatprep.subr.mxu0 %v335
        %930 = vmatpush1.xpose.msra.mxu0 %v334
        %931 = vmatprep.subr.mxu0 %v338
        %932 = vmatpush1.xpose.msra.mxu0 %v337
        %933 = vmatprep.subr.mxu0 %v341
        %934 = vmatpush1.xpose.msra.mxu0 %v340
        %935 = vmatprep.subr.mxu0 0.0
        %936 = vmatpush1.xpose.msra.mxu0 0.0
        %937 = vmatprep.subr.mxu0 0.0
        %938 = vmatpush1.xpose.msra.mxu0 0.0
        %939 = vmatprep.subr.mxu0 0.0
        %940 = vmatpush1.xpose.msra.mxu0 0.0
        %941 = vmatprep.subr.mxu0 0.0
        %942 = vmatpush1.xpose.msra.mxu0 0.0
        %943 = vmatprep.subr.mxu0 0.0
        %944 = vmatpush1.xpose.msra.mxu0 0.0
        %945 = vmatprep.subr.mxu0 0.0
        %946 = vmatpush1.xpose.msra.mxu0 0.0
        %947 = vmatprep.subr.mxu0 0.0
        %948 = vmatpush1.xpose.msra.mxu0 0.0
        %949 = vmatprep.mubr.f32.mxu0 %v877
        %950 = vmatmul.mubr.f32.gmra.mrb[0].mxu0 %v873
        %v951 = vpop.f32.mrb[0].mxu0
        %v952 = vadd.f32 0.0, %v951
        %v953 = vpop.f32.mrb[0].mxu0
        %v954 = vadd.f32 0.0, %v953
        %955 = vdwg.mxu0
        %956 = vmatprep.subr.mxu0 0.0
        %957 = vmatpush1.xpose.msra.mxu0 %v270
        %958 = vmatprep.subr.mxu0 0.0
        %959 = vmatpush1.xpose.msra.mxu0 %v273
        %960 = vmatprep.subr.mxu0 0.0
        %961 = vmatpush1.xpose.msra.mxu0 %v276
        %962 = vmatprep.subr.mxu0 0.0
        %963 = vmatpush1.xpose.msra.mxu0 %v279
        %964 = vmatprep.subr.mxu0 0.0
        %965 = vmatpush1.xpose.msra.mxu0 %v282
        %966 = vmatprep.subr.mxu0 0.0
        %967 = vmatpush1.xpose.msra.mxu0 %v285
        %968 = vmatprep.subr.mxu0 0.0
        %969 = vmatpush1.xpose.msra.mxu0 %v288
        %970 = vmatprep.subr.mxu0 0.0
        %971 = vmatpush1.xpose.msra.mxu0 %v291
        %972 = vmatprep.subr.mxu0 0.0
        %973 = vmatpush1.xpose.msra.mxu0 %v294
        %974 = vmatprep.subr.mxu0 0.0
        %975 = vmatpush1.xpose.msra.mxu0 %v297
        %976 = vmatprep.subr.mxu0 0.0
        %977 = vmatpush1.xpose.msra.mxu0 %v300
        %978 = vmatprep.subr.mxu0 0.0
        %979 = vmatpush1.xpose.msra.mxu0 %v303
        %980 = vmatprep.subr.mxu0 0.0
        %981 = vmatpush1.xpose.msra.mxu0 %v306
        %982 = vmatprep.subr.mxu0 0.0
        %983 = vmatpush1.xpose.msra.mxu0 %v309
        %984 = vmatprep.subr.mxu0 0.0
        %985 = vmatpush1.xpose.msra.mxu0 %v312
        %986 = vmatprep.subr.mxu0 0.0
        %987 = vmatpush1.xpose.msra.mxu0 %v315
        %988 = vmatprep.subr.mxu0 0.0
        %989 = vmatpush1.xpose.msra.mxu0 %v318
        %990 = vmatprep.subr.mxu0 0.0
        %991 = vmatpush1.xpose.msra.mxu0 %v321
        %992 = vmatprep.subr.mxu0 0.0
        %993 = vmatpush1.xpose.msra.mxu0 %v324
        %994 = vmatprep.subr.mxu0 0.0
        %995 = vmatpush1.xpose.msra.mxu0 %v327
        %996 = vmatprep.subr.mxu0 0.0
        %997 = vmatpush1.xpose.msra.mxu0 %v330
        %998 = vmatprep.subr.mxu0 0.0
        %999 = vmatpush1.xpose.msra.mxu0 %v333
        %1000 = vmatprep.subr.mxu0 0.0
        %1001 = vmatpush1.xpose.msra.mxu0 %v336
        %1002 = vmatprep.subr.mxu0 0.0
        %1003 = vmatpush1.xpose.msra.mxu0 %v339
        %1004 = vmatprep.subr.mxu0 0.0
        %1005 = vmatpush1.xpose.msra.mxu0 %v342
        %1006 = vmatprep.subr.mxu0 0.0
        %1007 = vmatpush1.xpose.msra.mxu0 0.0
        %1008 = vmatprep.subr.mxu0 0.0
        %1009 = vmatpush1.xpose.msra.mxu0 0.0
        %1010 = vmatprep.subr.mxu0 0.0
        %1011 = vmatpush1.xpose.msra.mxu0 0.0
        %1012 = vmatprep.subr.mxu0 0.0
        %1013 = vmatpush1.xpose.msra.mxu0 0.0
        %1014 = vmatprep.subr.mxu0 0.0
        %1015 = vmatpush1.xpose.msra.mxu0 0.0
        %1016 = vmatprep.subr.mxu0 0.0
        %1017 = vmatpush1.xpose.msra.mxu0 0.0
        %1018 = vmatprep.subr.mxu0 0.0
        %1019 = vmatpush1.xpose.msra.mxu0 0.0
        %1020 = vmatprep.mubr.f32.mxu0 0.0
        %1021 = vmatmul.mubr.f32.gmra.mrb[0].mxu0 %v881
        %v1022 = vpop.f32.mrb[0].mxu0
        %v1023 = vadd.f32 %v952, %v1022
        %v1024 = vpop.f32.mrb[0].mxu0
        %v1025 = vadd.f32 %v954, %v1024
        %1026 = vdwg.mxu0
        %1027 = vmatprep.subr.mxu0 %v344
        %1028 = vmatpush1.xpose.msra.mxu0 %v343
        %1029 = vmatprep.subr.mxu0 %v347
        %1030 = vmatpush1.xpose.msra.mxu0 %v346
        %1031 = vmatprep.subr.mxu0 %v350
        %1032 = vmatpush1.xpose.msra.mxu0 %v349
        %1033 = vmatprep.subr.mxu0 %v353
        %1034 = vmatpush1.xpose.msra.mxu0 %v352
        %1035 = vmatprep.subr.mxu0 %v356
        %1036 = vmatpush1.xpose.msra.mxu0 %v355
        %1037 = vmatprep.subr.mxu0 %v359
        %1038 = vmatpush1.xpose.msra.mxu0 %v358
        %1039 = vmatprep.subr.mxu0 %v362
        %1040 = vmatpush1.xpose.msra.mxu0 %v361
        %1041 = vmatprep.subr.mxu0 %v365
        %1042 = vmatpush1.xpose.msra.mxu0 %v364
        %1043 = vmatprep.subr.mxu0 %v368
        %1044 = vmatpush1.xpose.msra.mxu0 %v367
        %1045 = vmatprep.subr.mxu0 %v371
        %1046 = vmatpush1.xpose.msra.mxu0 %v370
        %1047 = vmatprep.subr.mxu0 %v374
        %1048 = vmatpush1.xpose.msra.mxu0 %v373
        %1049 = vmatprep.subr.mxu0 %v377
        %1050 = vmatpush1.xpose.msra.mxu0 %v376
        %1051 = vmatprep.subr.mxu0 %v380
        %1052 = vmatpush1.xpose.msra.mxu0 %v379
        %1053 = vmatprep.subr.mxu0 %v383
        %1054 = vmatpush1.xpose.msra.mxu0 %v382
        %1055 = vmatprep.subr.mxu0 %v386
        %1056 = vmatpush1.xpose.msra.mxu0 %v385
        %1057 = vmatprep.subr.mxu0 %v389
        %1058 = vmatpush1.xpose.msra.mxu0 %v388
        %1059 = vmatprep.subr.mxu0 %v392
        %1060 = vmatpush1.xpose.msra.mxu0 %v391
        %1061 = vmatprep.subr.mxu0 %v395
        %1062 = vmatpush1.xpose.msra.mxu0 %v394
        %1063 = vmatprep.subr.mxu0 %v398
        %1064 = vmatpush1.xpose.msra.mxu0 %v397
        %1065 = vmatprep.subr.mxu0 %v401
        %1066 = vmatpush1.xpose.msra.mxu0 %v400
        %1067 = vmatprep.subr.mxu0 %v404
        %1068 = vmatpush1.xpose.msra.mxu0 %v403
        %1069 = vmatprep.subr.mxu0 %v407
        %1070 = vmatpush1.xpose.msra.mxu0 %v406
        %1071 = vmatprep.subr.mxu0 %v410
        %1072 = vmatpush1.xpose.msra.mxu0 %v409
        %1073 = vmatprep.subr.mxu0 %v413
        %1074 = vmatpush1.xpose.msra.mxu0 %v412
        %1075 = vmatprep.subr.mxu0 %v416
        %1076 = vmatpush1.xpose.msra.mxu0 %v415
        %1077 = vmatprep.subr.mxu0 0.0
        %1078 = vmatpush1.xpose.msra.mxu0 0.0
        %1079 = vmatprep.subr.mxu0 0.0
        %1080 = vmatpush1.xpose.msra.mxu0 0.0
        %1081 = vmatprep.subr.mxu0 0.0
        %1082 = vmatpush1.xpose.msra.mxu0 0.0
        %1083 = vmatprep.subr.mxu0 0.0
        %1084 = vmatpush1.xpose.msra.mxu0 0.0
        %1085 = vmatprep.subr.mxu0 0.0
        %1086 = vmatpush1.xpose.msra.mxu0 0.0
        %1087 = vmatprep.subr.mxu0 0.0
        %1088 = vmatpush1.xpose.msra.mxu0 0.0
        %1089 = vmatprep.subr.mxu0 0.0
        %1090 = vmatpush1.xpose.msra.mxu0 0.0
        %1091 = vmatprep.mubr.f32.mxu0 %v877
        %1092 = vmatmul.mubr.f32.gmra.mrb[0].mxu0 %v873
        %v1093 = vpop.f32.mrb[0].mxu0
        %v1094 = vadd.f32 0.0, %v1093
        %v1095 = vpop.f32.mrb[0].mxu0
        %v1096 = vadd.f32 0.0, %v1095
        %1097 = vdwg.mxu0
        %1098 = vmatprep.subr.mxu0 0.0
        %1099 = vmatpush1.xpose.msra.mxu0 %v345
        %1100 = vmatprep.subr.mxu0 0.0
        %1101 = vmatpush1.xpose.msra.mxu0 %v348
        %1102 = vmatprep.subr.mxu0 0.0
        %1103 = vmatpush1.xpose.msra.mxu0 %v351
        %1104 = vmatprep.subr.mxu0 0.0
        %1105 = vmatpush1.xpose.msra.mxu0 %v354
        %1106 = vmatprep.subr.mxu0 0.0
        %1107 = vmatpush1.xpose.msra.mxu0 %v357
        %1108 = vmatprep.subr.mxu0 0.0
        %1109 = vmatpush1.xpose.msra.mxu0 %v360
        %1110 = vmatprep.subr.mxu0 0.0
        %1111 = vmatpush1.xpose.msra.mxu0 %v363
        %1112 = vmatprep.subr.mxu0 0.0
        %1113 = vmatpush1.xpose.msra.mxu0 %v366
        %1114 = vmatprep.subr.mxu0 0.0
        %1115 = vmatpush1.xpose.msra.mxu0 %v369
        %1116 = vmatprep.subr.mxu0 0.0
        %1117 = vmatpush1.xpose.msra.mxu0 %v372
        %1118 = vmatprep.subr.mxu0 0.0
        %1119 = vmatpush1.xpose.msra.mxu0 %v375
        %1120 = vmatprep.subr.mxu0 0.0
        %1121 = vmatpush1.xpose.msra.mxu0 %v378
        %1122 = vmatprep.subr.mxu0 0.0
        %1123 = vmatpush1.xpose.msra.mxu0 %v381
        %1124 = vmatprep.subr.mxu0 0.0
        %1125 = vmatpush1.xpose.msra.mxu0 %v384
        %1126 = vmatprep.subr.mxu0 0.0
        %1127 = vmatpush1.xpose.msra.mxu0 %v387
        %1128 = vmatprep.subr.mxu0 0.0
        %1129 = vmatpush1.xpose.msra.mxu0 %v390
        %1130 = vmatprep.subr.mxu0 0.0
        %1131 = vmatpush1.xpose.msra.mxu0 %v393
        %1132 = vmatprep.subr.mxu0 0.0
        %1133 = vmatpush1.xpose.msra.mxu0 %v396
        %1134 = vmatprep.subr.mxu0 0.0
        %1135 = vmatpush1.xpose.msra.mxu0 %v399
        %1136 = vmatprep.subr.mxu0 0.0
        %1137 = vmatpush1.xpose.msra.mxu0 %v402
        %1138 = vmatprep.subr.mxu0 0.0
        %1139 = vmatpush1.xpose.msra.mxu0 %v405
        %1140 = vmatprep.subr.mxu0 0.0
        %1141 = vmatpush1.xpose.msra.mxu0 %v408
        %1142 = vmatprep.subr.mxu0 0.0
        %1143 = vmatpush1.xpose.msra.mxu0 %v411
        %1144 = vmatprep.subr.mxu0 0.0
        %1145 = vmatpush1.xpose.msra.mxu0 %v414
        %1146 = vmatprep.subr.mxu0 0.0
        %1147 = vmatpush1.xpose.msra.mxu0 %v417
        %1148 = vmatprep.subr.mxu0 0.0
        %1149 = vmatpush1.xpose.msra.mxu0 0.0
        %1150 = vmatprep.subr.mxu0 0.0
        %1151 = vmatpush1.xpose.msra.mxu0 0.0
        %1152 = vmatprep.subr.mxu0 0.0
        %1153 = vmatpush1.xpose.msra.mxu0 0.0
        %1154 = vmatprep.subr.mxu0 0.0
        %1155 = vmatpush1.xpose.msra.mxu0 0.0
        %1156 = vmatprep.subr.mxu0 0.0
        %1157 = vmatpush1.xpose.msra.mxu0 0.0
        %1158 = vmatprep.subr.mxu0 0.0
        %1159 = vmatpush1.xpose.msra.mxu0 0.0
        %1160 = vmatprep.subr.mxu0 0.0
        %1161 = vmatpush1.xpose.msra.mxu0 0.0
        %1162 = vmatprep.mubr.f32.mxu0 0.0
        %1163 = vmatmul.mubr.f32.gmra.mrb[0].mxu0 %v881
        %v1164 = vpop.f32.mrb[0].mxu0
        %v1165 = vadd.f32 %v1094, %v1164
        %v1166 = vpop.f32.mrb[0].mxu0
        %v1167 = vadd.f32 %v1096, %v1166
        %1168 = vdwg.mxu0
        %1169 = vmatprep.subr.mxu0 %v419
        %1170 = vmatpush1.xpose.msra.mxu0 %v418
        %1171 = vmatprep.subr.mxu0 %v422
        %1172 = vmatpush1.xpose.msra.mxu0 %v421
        %1173 = vmatprep.subr.mxu0 %v425
        %1174 = vmatpush1.xpose.msra.mxu0 %v424
        %1175 = vmatprep.subr.mxu0 %v428
        %1176 = vmatpush1.xpose.msra.mxu0 %v427
        %1177 = vmatprep.subr.mxu0 %v431
        %1178 = vmatpush1.xpose.msra.mxu0 %v430
        %1179 = vmatprep.subr.mxu0 %v434
        %1180 = vmatpush1.xpose.msra.mxu0 %v433
        %1181 = vmatprep.subr.mxu0 %v437
        %1182 = vmatpush1.xpose.msra.mxu0 %v436
        %1183 = vmatprep.subr.mxu0 %v440
        %1184 = vmatpush1.xpose.msra.mxu0 %v439
        %1185 = vmatprep.subr.mxu0 %v443
        %1186 = vmatpush1.xpose.msra.mxu0 %v442
        %1187 = vmatprep.subr.mxu0 %v446
        %1188 = vmatpush1.xpose.msra.mxu0 %v445
        %1189 = vmatprep.subr.mxu0 %v449
        %1190 = vmatpush1.xpose.msra.mxu0 %v448
        %1191 = vmatprep.subr.mxu0 %v452
        %1192 = vmatpush1.xpose.msra.mxu0 %v451
        %1193 = vmatprep.subr.mxu0 %v455
        %1194 = vmatpush1.xpose.msra.mxu0 %v454
        %1195 = vmatprep.subr.mxu0 %v458
        %1196 = vmatpush1.xpose.msra.mxu0 %v457
        %1197 = vmatprep.subr.mxu0 %v461
        %1198 = vmatpush1.xpose.msra.mxu0 %v460
        %1199 = vmatprep.subr.mxu0 %v464
        %1200 = vmatpush1.xpose.msra.mxu0 %v463
        %1201 = vmatprep.subr.mxu0 %v467
        %1202 = vmatpush1.xpose.msra.mxu0 %v466
        %1203 = vmatprep.subr.mxu0 %v470
        %1204 = vmatpush1.xpose.msra.mxu0 %v469
        %1205 = vmatprep.subr.mxu0 %v473
        %1206 = vmatpush1.xpose.msra.mxu0 %v472
        %1207 = vmatprep.subr.mxu0 %v476
        %1208 = vmatpush1.xpose.msra.mxu0 %v475
        %1209 = vmatprep.subr.mxu0 %v479
        %1210 = vmatpush1.xpose.msra.mxu0 %v478
        %1211 = vmatprep.subr.mxu0 %v482
        %1212 = vmatpush1.xpose.msra.mxu0 %v481
        %1213 = vmatprep.subr.mxu0 %v485
        %1214 = vmatpush1.xpose.msra.mxu0 %v484
        %1215 = vmatprep.subr.mxu0 %v488
        %1216 = vmatpush1.xpose.msra.mxu0 %v487
        %1217 = vmatprep.subr.mxu0 %v491
        %1218 = vmatpush1.xpose.msra.mxu0 %v490
        %1219 = vmatprep.subr.mxu0 0.0
        %1220 = vmatpush1.xpose.msra.mxu0 0.0
        %1221 = vmatprep.subr.mxu0 0.0
        %1222 = vmatpush1.xpose.msra.mxu0 0.0
        %1223 = vmatprep.subr.mxu0 0.0
        %1224 = vmatpush1.xpose.msra.mxu0 0.0
        %1225 = vmatprep.subr.mxu0 0.0
        %1226 = vmatpush1.xpose.msra.mxu0 0.0
        %1227 = vmatprep.subr.mxu0 0.0
        %1228 = vmatpush1.xpose.msra.mxu0 0.0
        %1229 = vmatprep.subr.mxu0 0.0
        %1230 = vmatpush1.xpose.msra.mxu0 0.0
        %1231 = vmatprep.subr.mxu0 0.0
        %1232 = vmatpush1.xpose.msra.mxu0 0.0
        %1233 = vmatprep.mubr.f32.mxu0 %v877
        %1234 = vmatmul.mubr.f32.gmra.mrb[0].mxu0 %v873
        %v1235 = vpop.f32.mrb[0].mxu0
        %v1236 = vadd.f32 0.0, %v1235
        %v1237 = vpop.f32.mrb[0].mxu0
        %v1238 = vadd.f32 0.0, %v1237
        %1239 = vdwg.mxu0
        %1240 = vmatprep.subr.mxu0 0.0
        %1241 = vmatpush1.xpose.msra.mxu0 %v420
        %1242 = vmatprep.subr.mxu0 0.0
        %1243 = vmatpush1.xpose.msra.mxu0 %v423
        %1244 = vmatprep.subr.mxu0 0.0
        %1245 = vmatpush1.xpose.msra.mxu0 %v426
        %1246 = vmatprep.subr.mxu0 0.0
        %1247 = vmatpush1.xpose.msra.mxu0 %v429
        %1248 = vmatprep.subr.mxu0 0.0
        %1249 = vmatpush1.xpose.msra.mxu0 %v432
        %1250 = vmatprep.subr.mxu0 0.0
        %1251 = vmatpush1.xpose.msra.mxu0 %v435
        %1252 = vmatprep.subr.mxu0 0.0
        %1253 = vmatpush1.xpose.msra.mxu0 %v438
        %1254 = vmatprep.subr.mxu0 0.0
        %1255 = vmatpush1.xpose.msra.mxu0 %v441
        %1256 = vmatprep.subr.mxu0 0.0
        %1257 = vmatpush1.xpose.msra.mxu0 %v444
        %1258 = vmatprep.subr.mxu0 0.0
        %1259 = vmatpush1.xpose.msra.mxu0 %v447
        %1260 = vmatprep.subr.mxu0 0.0
        %1261 = vmatpush1.xpose.msra.mxu0 %v450
        %1262 = vmatprep.subr.mxu0 0.0
        %1263 = vmatpush1.xpose.msra.mxu0 %v453
        %1264 = vmatprep.subr.mxu0 0.0
        %1265 = vmatpush1.xpose.msra.mxu0 %v456
        %1266 = vmatprep.subr.mxu0 0.0
        %1267 = vmatpush1.xpose.msra.mxu0 %v459
        %1268 = vmatprep.subr.mxu0 0.0
        %1269 = vmatpush1.xpose.msra.mxu0 %v462
        %1270 = vmatprep.subr.mxu0 0.0
        %1271 = vmatpush1.xpose.msra.mxu0 %v465
        %1272 = vmatprep.subr.mxu0 0.0
        %1273 = vmatpush1.xpose.msra.mxu0 %v468
        %1274 = vmatprep.subr.mxu0 0.0
        %1275 = vmatpush1.xpose.msra.mxu0 %v471
        %1276 = vmatprep.subr.mxu0 0.0
        %1277 = vmatpush1.xpose.msra.mxu0 %v474
        %1278 = vmatprep.subr.mxu0 0.0
        %1279 = vmatpush1.xpose.msra.mxu0 %v477
        %1280 = vmatprep.subr.mxu0 0.0
        %1281 = vmatpush1.xpose.msra.mxu0 %v480
        %1282 = vmatprep.subr.mxu0 0.0
        %1283 = vmatpush1.xpose.msra.mxu0 %v483
        %1284 = vmatprep.subr.mxu0 0.0
        %1285 = vmatpush1.xpose.msra.mxu0 %v486
        %1286 = vmatprep.subr.mxu0 0.0
        %1287 = vmatpush1.xpose.msra.mxu0 %v489
        %1288 = vmatprep.subr.mxu0 0.0
        %1289 = vmatpush1.xpose.msra.mxu0 %v492
        %1290 = vmatprep.subr.mxu0 0.0
        %1291 = vmatpush1.xpose.msra.mxu0 0.0
        %1292 = vmatprep.subr.mxu0 0.0
        %1293 = vmatpush1.xpose.msra.mxu0 0.0
        %1294 = vmatprep.subr.mxu0 0.0
        %1295 = vmatpush1.xpose.msra.mxu0 0.0
        %1296 = vmatprep.subr.mxu0 0.0
        %1297 = vmatpush1.xpose.msra.mxu0 0.0
        %1298 = vmatprep.subr.mxu0 0.0
        %1299 = vmatpush1.xpose.msra.mxu0 0.0
        %1300 = vmatprep.subr.mxu0 0.0
        %1301 = vmatpush1.xpose.msra.mxu0 0.0
        %1302 = vmatprep.subr.mxu0 0.0
        %1303 = vmatpush1.xpose.msra.mxu0 0.0
        %1304 = vmatprep.mubr.f32.mxu0 0.0
        %1305 = vmatmul.mubr.f32.gmra.mrb[0].mxu0 %v881
        %v1306 = vpop.f32.mrb[0].mxu0
        %v1307 = vadd.f32 %v1236, %v1306
        %v1308 = vpop.f32.mrb[0].mxu0
        %v1309 = vadd.f32 %v1238, %v1308
        %1310 = vdwg.mxu0
        %1311 = vmatprep.subr.mxu0 %v494
        %1312 = vmatpush1.xpose.msra.mxu0 %v493
        %1313 = vmatprep.subr.mxu0 %v497
        %1314 = vmatpush1.xpose.msra.mxu0 %v496
        %1315 = vmatprep.subr.mxu0 %v500
        %1316 = vmatpush1.xpose.msra.mxu0 %v499
        %1317 = vmatprep.subr.mxu0 %v503
        %1318 = vmatpush1.xpose.msra.mxu0 %v502
        %1319 = vmatprep.subr.mxu0 %v506
        %1320 = vmatpush1.xpose.msra.mxu0 %v505
        %1321 = vmatprep.subr.mxu0 %v509
        %1322 = vmatpush1.xpose.msra.mxu0 %v508
        %1323 = vmatprep.subr.mxu0 %v512
        %1324 = vmatpush1.xpose.msra.mxu0 %v511
        %1325 = vmatprep.subr.mxu0 %v515
        %1326 = vmatpush1.xpose.msra.mxu0 %v514
        %1327 = vmatprep.subr.mxu0 %v518
        %1328 = vmatpush1.xpose.msra.mxu0 %v517
        %1329 = vmatprep.subr.mxu0 %v521
        %1330 = vmatpush1.xpose.msra.mxu0 %v520
        %1331 = vmatprep.subr.mxu0 %v524
        %1332 = vmatpush1.xpose.msra.mxu0 %v523
        %1333 = vmatprep.subr.mxu0 %v527
        %1334 = vmatpush1.xpose.msra.mxu0 %v526
        %1335 = vmatprep.subr.mxu0 %v530
        %1336 = vmatpush1.xpose.msra.mxu0 %v529
        %1337 = vmatprep.subr.mxu0 %v533
        %1338 = vmatpush1.xpose.msra.mxu0 %v532
        %1339 = vmatprep.subr.mxu0 %v536
        %1340 = vmatpush1.xpose.msra.mxu0 %v535
        %1341 = vmatprep.subr.mxu0 %v539
        %1342 = vmatpush1.xpose.msra.mxu0 %v538
        %1343 = vmatprep.subr.mxu0 %v542
        %1344 = vmatpush1.xpose.msra.mxu0 %v541
        %1345 = vmatprep.subr.mxu0 %v545
        %1346 = vmatpush1.xpose.msra.mxu0 %v544
        %1347 = vmatprep.subr.mxu0 %v548
        %1348 = vmatpush1.xpose.msra.mxu0 %v547
        %1349 = vmatprep.subr.mxu0 %v551
        %1350 = vmatpush1.xpose.msra.mxu0 %v550
        %1351 = vmatprep.subr.mxu0 %v554
        %1352 = vmatpush1.xpose.msra.mxu0 %v553
        %1353 = vmatprep.subr.mxu0 %v557
        %1354 = vmatpush1.xpose.msra.mxu0 %v556
        %1355 = vmatprep.subr.mxu0 %v560
        %1356 = vmatpush1.xpose.msra.mxu0 %v559
        %1357 = vmatprep.subr.mxu0 %v563
        %1358 = vmatpush1.xpose.msra.mxu0 %v562
        %1359 = vmatprep.subr.mxu0 %v566
        %1360 = vmatpush1.xpose.msra.mxu0 %v565
        %1361 = vmatprep.subr.mxu0 0.0
        %1362 = vmatpush1.xpose.msra.mxu0 0.0
        %1363 = vmatprep.subr.mxu0 0.0
        %1364 = vmatpush1.xpose.msra.mxu0 0.0
        %1365 = vmatprep.subr.mxu0 0.0
        %1366 = vmatpush1.xpose.msra.mxu0 0.0
        %1367 = vmatprep.subr.mxu0 0.0
        %1368 = vmatpush1.xpose.msra.mxu0 0.0
        %1369 = vmatprep.subr.mxu0 0.0
        %1370 = vmatpush1.xpose.msra.mxu0 0.0
        %1371 = vmatprep.subr.mxu0 0.0
        %1372 = vmatpush1.xpose.msra.mxu0 0.0
        %1373 = vmatprep.subr.mxu0 0.0
        %1374 = vmatpush1.xpose.msra.mxu0 0.0
        %1375 = vmatprep.mubr.f32.mxu0 %v877
        %1376 = vmatmul.mubr.f32.gmra.mrb[0].mxu0 %v873
        %v1377 = vpop.f32.mrb[0].mxu0
        %v1378 = vadd.f32 0.0, %v1377
        %v1379 = vpop.f32.mrb[0].mxu0
        %v1380 = vadd.f32 0.0, %v1379
        %1381 = vdwg.mxu0
        %1382 = vmatprep.subr.mxu0 0.0
        %1383 = vmatpush1.xpose.msra.mxu0 %v495
        %1384 = vmatprep.subr.mxu0 0.0
        %1385 = vmatpush1.xpose.msra.mxu0 %v498
        %1386 = vmatprep.subr.mxu0 0.0
        %1387 = vmatpush1.xpose.msra.mxu0 %v501
        %1388 = vmatprep.subr.mxu0 0.0
        %1389 = vmatpush1.xpose.msra.mxu0 %v504
        %1390 = vmatprep.subr.mxu0 0.0
        %1391 = vmatpush1.xpose.msra.mxu0 %v507
        %1392 = vmatprep.subr.mxu0 0.0
        %1393 = vmatpush1.xpose.msra.mxu0 %v510
        %1394 = vmatprep.subr.mxu0 0.0
        %1395 = vmatpush1.xpose.msra.mxu0 %v513
        %1396 = vmatprep.subr.mxu0 0.0
        %1397 = vmatpush1.xpose.msra.mxu0 %v516
        %1398 = vmatprep.subr.mxu0 0.0
        %1399 = vmatpush1.xpose.msra.mxu0 %v519
        %1400 = vmatprep.subr.mxu0 0.0
        %1401 = vmatpush1.xpose.msra.mxu0 %v522
        %1402 = vmatprep.subr.mxu0 0.0
        %1403 = vmatpush1.xpose.msra.mxu0 %v525
        %1404 = vmatprep.subr.mxu0 0.0
        %1405 = vmatpush1.xpose.msra.mxu0 %v528
        %1406 = vmatprep.subr.mxu0 0.0
        %1407 = vmatpush1.xpose.msra.mxu0 %v531
        %1408 = vmatprep.subr.mxu0 0.0
        %1409 = vmatpush1.xpose.msra.mxu0 %v534
        %1410 = vmatprep.subr.mxu0 0.0
        %1411 = vmatpush1.xpose.msra.mxu0 %v537
        %1412 = vmatprep.subr.mxu0 0.0
        %1413 = vmatpush1.xpose.msra.mxu0 %v540
        %1414 = vmatprep.subr.mxu0 0.0
        %1415 = vmatpush1.xpose.msra.mxu0 %v543
        %1416 = vmatprep.subr.mxu0 0.0
        %1417 = vmatpush1.xpose.msra.mxu0 %v546
        %1418 = vmatprep.subr.mxu0 0.0
        %1419 = vmatpush1.xpose.msra.mxu0 %v549
        %1420 = vmatprep.subr.mxu0 0.0
        %1421 = vmatpush1.xpose.msra.mxu0 %v552
        %1422 = vmatprep.subr.mxu0 0.0
        %1423 = vmatpush1.xpose.msra.mxu0 %v555
        %1424 = vmatprep.subr.mxu0 0.0
        %1425 = vmatpush1.xpose.msra.mxu0 %v558
        %1426 = vmatprep.subr.mxu0 0.0
        %1427 = vmatpush1.xpose.msra.mxu0 %v561
        %1428 = vmatprep.subr.mxu0 0.0
        %1429 = vmatpush1.xpose.msra.mxu0 %v564
        %1430 = vmatprep.subr.mxu0 0.0
        %1431 = vmatpush1.xpose.msra.mxu0 %v567
        %1432 = vmatprep.subr.mxu0 0.0
        %1433 = vmatpush1.xpose.msra.mxu0 0.0
        %1434 = vmatprep.subr.mxu0 0.0
        %1435 = vmatpush1.xpose.msra.mxu0 0.0
        %1436 = vmatprep.subr.mxu0 0.0
        %1437 = vmatpush1.xpose.msra.mxu0 0.0
        %1438 = vmatprep.subr.mxu0 0.0
        %1439 = vmatpush1.xpose.msra.mxu0 0.0
        %1440 = vmatprep.subr.mxu0 0.0
        %1441 = vmatpush1.xpose.msra.mxu0 0.0
        %1442 = vmatprep.subr.mxu0 0.0
        %1443 = vmatpush1.xpose.msra.mxu0 0.0
        %1444 = vmatprep.subr.mxu0 0.0
        %1445 = vmatpush1.xpose.msra.mxu0 0.0
        %1446 = vmatprep.mubr.f32.mxu0 0.0
        %1447 = vmatmul.mubr.f32.gmra.mrb[0].mxu0 %v881
        %v1448 = vpop.f32.mrb[0].mxu0
        %v1449 = vadd.f32 %v1378, %v1448
        %v1450 = vpop.f32.mrb[0].mxu0
        %v1451 = vadd.f32 %v1380, %v1450
        %1452 = vdwg.mxu0
        %1453 = vmatprep.subr.mxu0 %v569
        %1454 = vmatpush1.xpose.msra.mxu0 %v568
        %1455 = vmatprep.subr.mxu0 %v572
        %1456 = vmatpush1.xpose.msra.mxu0 %v571
        %1457 = vmatprep.subr.mxu0 %v575
        %1458 = vmatpush1.xpose.msra.mxu0 %v574
        %1459 = vmatprep.subr.mxu0 %v578
        %1460 = vmatpush1.xpose.msra.mxu0 %v577
        %1461 = vmatprep.subr.mxu0 %v581
        %1462 = vmatpush1.xpose.msra.mxu0 %v580
        %1463 = vmatprep.subr.mxu0 %v584
        %1464 = vmatpush1.xpose.msra.mxu0 %v583
        %1465 = vmatprep.subr.mxu0 %v587
        %1466 = vmatpush1.xpose.msra.mxu0 %v586
        %1467 = vmatprep.subr.mxu0 %v590
        %1468 = vmatpush1.xpose.msra.mxu0 %v589
        %1469 = vmatprep.subr.mxu0 %v593
        %1470 = vmatpush1.xpose.msra.mxu0 %v592
        %1471 = vmatprep.subr.mxu0 %v596
        %1472 = vmatpush1.xpose.msra.mxu0 %v595
        %1473 = vmatprep.subr.mxu0 %v599
        %1474 = vmatpush1.xpose.msra.mxu0 %v598
        %1475 = vmatprep.subr.mxu0 %v602
        %1476 = vmatpush1.xpose.msra.mxu0 %v601
        %1477 = vmatprep.subr.mxu0 %v605
        %1478 = vmatpush1.xpose.msra.mxu0 %v604
        %1479 = vmatprep.subr.mxu0 %v608
        %1480 = vmatpush1.xpose.msra.mxu0 %v607
        %1481 = vmatprep.subr.mxu0 %v611
        %1482 = vmatpush1.xpose.msra.mxu0 %v610
        %1483 = vmatprep.subr.mxu0 %v614
        %1484 = vmatpush1.xpose.msra.mxu0 %v613
        %1485 = vmatprep.subr.mxu0 %v617
        %1486 = vmatpush1.xpose.msra.mxu0 %v616
        %1487 = vmatprep.subr.mxu0 %v620
        %1488 = vmatpush1.xpose.msra.mxu0 %v619
        %1489 = vmatprep.subr.mxu0 %v623
        %1490 = vmatpush1.xpose.msra.mxu0 %v622
        %1491 = vmatprep.subr.mxu0 %v626
        %1492 = vmatpush1.xpose.msra.mxu0 %v625
        %1493 = vmatprep.subr.mxu0 %v629
        %1494 = vmatpush1.xpose.msra.mxu0 %v628
        %1495 = vmatprep.subr.mxu0 %v632
        %1496 = vmatpush1.xpose.msra.mxu0 %v631
        %1497 = vmatprep.subr.mxu0 %v635
        %1498 = vmatpush1.xpose.msra.mxu0 %v634
        %1499 = vmatprep.subr.mxu0 %v638
        %1500 = vmatpush1.xpose.msra.mxu0 %v637
        %1501 = vmatprep.subr.mxu0 %v641
        %1502 = vmatpush1.xpose.msra.mxu0 %v640
        %1503 = vmatprep.subr.mxu0 0.0
        %1504 = vmatpush1.xpose.msra.mxu0 0.0
        %1505 = vmatprep.subr.mxu0 0.0
        %1506 = vmatpush1.xpose.msra.mxu0 0.0
        %1507 = vmatprep.subr.mxu0 0.0
        %1508 = vmatpush1.xpose.msra.mxu0 0.0
        %1509 = vmatprep.subr.mxu0 0.0
        %1510 = vmatpush1.xpose.msra.mxu0 0.0
        %1511 = vmatprep.subr.mxu0 0.0
        %1512 = vmatpush1.xpose.msra.mxu0 0.0
        %1513 = vmatprep.subr.mxu0 0.0
        %1514 = vmatpush1.xpose.msra.mxu0 0.0
        %1515 = vmatprep.subr.mxu0 0.0
        %1516 = vmatpush1.xpose.msra.mxu0 0.0
        %1517 = vmatprep.mubr.f32.mxu0 %v877
        %1518 = vmatmul.mubr.f32.gmra.mrb[0].mxu0 %v873
        %v1519 = vpop.f32.mrb[0].mxu0
        %v1520 = vadd.f32 0.0, %v1519
        %v1521 = vpop.f32.mrb[0].mxu0
        %v1522 = vadd.f32 0.0, %v1521
        %1523 = vdwg.mxu0
        %1524 = vmatprep.subr.mxu0 0.0
        %1525 = vmatpush1.xpose.msra.mxu0 %v570
        %1526 = vmatprep.subr.mxu0 0.0
        %1527 = vmatpush1.xpose.msra.mxu0 %v573
        %1528 = vmatprep.subr.mxu0 0.0
        %1529 = vmatpush1.xpose.msra.mxu0 %v576
        %1530 = vmatprep.subr.mxu0 0.0
        %1531 = vmatpush1.xpose.msra.mxu0 %v579
        %1532 = vmatprep.subr.mxu0 0.0
        %1533 = vmatpush1.xpose.msra.mxu0 %v582
        %1534 = vmatprep.subr.mxu0 0.0
        %1535 = vmatpush1.xpose.msra.mxu0 %v585
        %1536 = vmatprep.subr.mxu0 0.0
        %1537 = vmatpush1.xpose.msra.mxu0 %v588
        %1538 = vmatprep.subr.mxu0 0.0
        %1539 = vmatpush1.xpose.msra.mxu0 %v591
        %1540 = vmatprep.subr.mxu0 0.0
        %1541 = vmatpush1.xpose.msra.mxu0 %v594
        %1542 = vmatprep.subr.mxu0 0.0
        %1543 = vmatpush1.xpose.msra.mxu0 %v597
        %1544 = vmatprep.subr.mxu0 0.0
        %1545 = vmatpush1.xpose.msra.mxu0 %v600
        %1546 = vmatprep.subr.mxu0 0.0
        %1547 = vmatpush1.xpose.msra.mxu0 %v603
        %1548 = vmatprep.subr.mxu0 0.0
        %1549 = vmatpush1.xpose.msra.mxu0 %v606
        %1550 = vmatprep.subr.mxu0 0.0
        %1551 = vmatpush1.xpose.msra.mxu0 %v609
        %1552 = vmatprep.subr.mxu0 0.0
        %1553 = vmatpush1.xpose.msra.mxu0 %v612
        %1554 = vmatprep.subr.mxu0 0.0
        %1555 = vmatpush1.xpose.msra.mxu0 %v615
        %1556 = vmatprep.subr.mxu0 0.0
        %1557 = vmatpush1.xpose.msra.mxu0 %v618
        %1558 = vmatprep.subr.mxu0 0.0
        %1559 = vmatpush1.xpose.msra.mxu0 %v621
        %1560 = vmatprep.subr.mxu0 0.0
        %1561 = vmatpush1.xpose.msra.mxu0 %v624
        %1562 = vmatprep.subr.mxu0 0.0
        %1563 = vmatpush1.xpose.msra.mxu0 %v627
        %1564 = vmatprep.subr.mxu0 0.0
        %1565 = vmatpush1.xpose.msra.mxu0 %v630
        %1566 = vmatprep.subr.mxu0 0.0
        %1567 = vmatpush1.xpose.msra.mxu0 %v633
        %1568 = vmatprep.subr.mxu0 0.0
        %1569 = vmatpush1.xpose.msra.mxu0 %v636
        %1570 = vmatprep.subr.mxu0 0.0
        %1571 = vmatpush1.xpose.msra.mxu0 %v639
        %1572 = vmatprep.subr.mxu0 0.0
        %1573 = vmatpush1.xpose.msra.mxu0 %v642
        %1574 = vmatprep.subr.mxu0 0.0
        %1575 = vmatpush1.xpose.msra.mxu0 0.0
        %1576 = vmatprep.subr.mxu0 0.0
        %1577 = vmatpush1.xpose.msra.mxu0 0.0
        %1578 = vmatprep.subr.mxu0 0.0
        %1579 = vmatpush1.xpose.msra.mxu0 0.0
        %1580 = vmatprep.subr.mxu0 0.0
        %1581 = vmatpush1.xpose.msra.mxu0 0.0
        %1582 = vmatprep.subr.mxu0 0.0
        %1583 = vmatpush1.xpose.msra.mxu0 0.0
        %1584 = vmatprep.subr.mxu0 0.0
        %1585 = vmatpush1.xpose.msra.mxu0 0.0
        %1586 = vmatprep.subr.mxu0 0.0
        %1587 = vmatpush1.xpose.msra.mxu0 0.0
        %1588 = vmatprep.mubr.f32.mxu0 0.0
        %1589 = vmatmul.mubr.f32.gmra.mrb[0].mxu0 %v881
        %v1590 = vpop.f32.mrb[0].mxu0
        %v1591 = vadd.f32 %v1520, %v1590
        %v1592 = vpop.f32.mrb[0].mxu0
        %v1593 = vadd.f32 %v1522, %v1592
        %1594 = vdwg.mxu0
        %1595 = vmatprep.subr.mxu0 %v644
        %1596 = vmatpush1.xpose.msra.mxu0 %v643
        %1597 = vmatprep.subr.mxu0 %v647
        %1598 = vmatpush1.xpose.msra.mxu0 %v646
        %1599 = vmatprep.subr.mxu0 %v650
        %1600 = vmatpush1.xpose.msra.mxu0 %v649
        %1601 = vmatprep.subr.mxu0 %v653
        %1602 = vmatpush1.xpose.msra.mxu0 %v652
        %1603 = vmatprep.subr.mxu0 %v656
        %1604 = vmatpush1.xpose.msra.mxu0 %v655
        %1605 = vmatprep.subr.mxu0 %v659
        %1606 = vmatpush1.xpose.msra.mxu0 %v658
        %1607 = vmatprep.subr.mxu0 %v662
        %1608 = vmatpush1.xpose.msra.mxu0 %v661
        %1609 = vmatprep.subr.mxu0 %v665
        %1610 = vmatpush1.xpose.msra.mxu0 %v664
        %1611 = vmatprep.subr.mxu0 %v668
        %1612 = vmatpush1.xpose.msra.mxu0 %v667
        %1613 = vmatprep.subr.mxu0 %v671
        %1614 = vmatpush1.xpose.msra.mxu0 %v670
        %1615 = vmatprep.subr.mxu0 %v674
        %1616 = vmatpush1.xpose.msra.mxu0 %v673
        %1617 = vmatprep.subr.mxu0 %v677
        %1618 = vmatpush1.xpose.msra.mxu0 %v676
        %1619 = vmatprep.subr.mxu0 %v680
        %1620 = vmatpush1.xpose.msra.mxu0 %v679
        %1621 = vmatprep.subr.mxu0 %v683
        %1622 = vmatpush1.xpose.msra.mxu0 %v682
        %1623 = vmatprep.subr.mxu0 %v686
        %1624 = vmatpush1.xpose.msra.mxu0 %v685
        %1625 = vmatprep.subr.mxu0 %v689
        %1626 = vmatpush1.xpose.msra.mxu0 %v688
        %1627 = vmatprep.subr.mxu0 %v692
        %1628 = vmatpush1.xpose.msra.mxu0 %v691
        %1629 = vmatprep.subr.mxu0 %v695
        %1630 = vmatpush1.xpose.msra.mxu0 %v694
        %1631 = vmatprep.subr.mxu0 %v698
        %1632 = vmatpush1.xpose.msra.mxu0 %v697
        %1633 = vmatprep.subr.mxu0 %v701
        %1634 = vmatpush1.xpose.msra.mxu0 %v700
        %1635 = vmatprep.subr.mxu0 %v704
        %1636 = vmatpush1.xpose.msra.mxu0 %v703
        %1637 = vmatprep.subr.mxu0 %v707
        %1638 = vmatpush1.xpose.msra.mxu0 %v706
        %1639 = vmatprep.subr.mxu0 %v710
        %1640 = vmatpush1.xpose.msra.mxu0 %v709
        %1641 = vmatprep.subr.mxu0 %v713
        %1642 = vmatpush1.xpose.msra.mxu0 %v712
        %1643 = vmatprep.subr.mxu0 %v716
        %1644 = vmatpush1.xpose.msra.mxu0 %v715
        %1645 = vmatprep.subr.mxu0 0.0
        %1646 = vmatpush1.xpose.msra.mxu0 0.0
        %1647 = vmatprep.subr.mxu0 0.0
        %1648 = vmatpush1.xpose.msra.mxu0 0.0
        %1649 = vmatprep.subr.mxu0 0.0
        %1650 = vmatpush1.xpose.msra.mxu0 0.0
        %1651 = vmatprep.subr.mxu0 0.0
        %1652 = vmatpush1.xpose.msra.mxu0 0.0
        %1653 = vmatprep.subr.mxu0 0.0
        %1654 = vmatpush1.xpose.msra.mxu0 0.0
        %1655 = vmatprep.subr.mxu0 0.0
        %1656 = vmatpush1.xpose.msra.mxu0 0.0
        %1657 = vmatprep.subr.mxu0 0.0
        %1658 = vmatpush1.xpose.msra.mxu0 0.0
        %1659 = vmatprep.mubr.f32.mxu0 %v877
        %1660 = vmatmul.mubr.f32.gmra.mrb[0].mxu0 %v873
        %v1661 = vpop.f32.mrb[0].mxu0
        %v1662 = vadd.f32 0.0, %v1661
        %v1663 = vpop.f32.mrb[0].mxu0
        %v1664 = vadd.f32 0.0, %v1663
        %1665 = vdwg.mxu0
        %1666 = vmatprep.subr.mxu0 0.0
        %1667 = vmatpush1.xpose.msra.mxu0 %v645
        %1668 = vmatprep.subr.mxu0 0.0
        %1669 = vmatpush1.xpose.msra.mxu0 %v648
        %1670 = vmatprep.subr.mxu0 0.0
        %1671 = vmatpush1.xpose.msra.mxu0 %v651
        %1672 = vmatprep.subr.mxu0 0.0
        %1673 = vmatpush1.xpose.msra.mxu0 %v654
        %1674 = vmatprep.subr.mxu0 0.0
        %1675 = vmatpush1.xpose.msra.mxu0 %v657
        %1676 = vmatprep.subr.mxu0 0.0
        %1677 = vmatpush1.xpose.msra.mxu0 %v660
        %1678 = vmatprep.subr.mxu0 0.0
        %1679 = vmatpush1.xpose.msra.mxu0 %v663
        %1680 = vmatprep.subr.mxu0 0.0
        %1681 = vmatpush1.xpose.msra.mxu0 %v666
        %1682 = vmatprep.subr.mxu0 0.0
        %1683 = vmatpush1.xpose.msra.mxu0 %v669
        %1684 = vmatprep.subr.mxu0 0.0
        %1685 = vmatpush1.xpose.msra.mxu0 %v672
        %1686 = vmatprep.subr.mxu0 0.0
        %1687 = vmatpush1.xpose.msra.mxu0 %v675
        %1688 = vmatprep.subr.mxu0 0.0
        %1689 = vmatpush1.xpose.msra.mxu0 %v678
        %1690 = vmatprep.subr.mxu0 0.0
        %1691 = vmatpush1.xpose.msra.mxu0 %v681
        %1692 = vmatprep.subr.mxu0 0.0
        %1693 = vmatpush1.xpose.msra.mxu0 %v684
        %1694 = vmatprep.subr.mxu0 0.0
        %1695 = vmatpush1.xpose.msra.mxu0 %v687
        %1696 = vmatprep.subr.mxu0 0.0
        %1697 = vmatpush1.xpose.msra.mxu0 %v690
        %1698 = vmatprep.subr.mxu0 0.0
        %1699 = vmatpush1.xpose.msra.mxu0 %v693
        %1700 = vmatprep.subr.mxu0 0.0
        %1701 = vmatpush1.xpose.msra.mxu0 %v696
        %1702 = vmatprep.subr.mxu0 0.0
        %1703 = vmatpush1.xpose.msra.mxu0 %v699
        %1704 = vmatprep.subr.mxu0 0.0
        %1705 = vmatpush1.xpose.msra.mxu0 %v702
        %1706 = vmatprep.subr.mxu0 0.0
        %1707 = vmatpush1.xpose.msra.mxu0 %v705
        %1708 = vmatprep.subr.mxu0 0.0
        %1709 = vmatpush1.xpose.msra.mxu0 %v708
        %1710 = vmatprep.subr.mxu0 0.0
        %1711 = vmatpush1.xpose.msra.mxu0 %v711
        %1712 = vmatprep.subr.mxu0 0.0
        %1713 = vmatpush1.xpose.msra.mxu0 %v714
        %1714 = vmatprep.subr.mxu0 0.0
        %1715 = vmatpush1.xpose.msra.mxu0 %v717
        %1716 = vmatprep.subr.mxu0 0.0
        %1717 = vmatpush1.xpose.msra.mxu0 0.0
        %1718 = vmatprep.subr.mxu0 0.0
        %1719 = vmatpush1.xpose.msra.mxu0 0.0
        %1720 = vmatprep.subr.mxu0 0.0
        %1721 = vmatpush1.xpose.msra.mxu0 0.0
        %1722 = vmatprep.subr.mxu0 0.0
        %1723 = vmatpush1.xpose.msra.mxu0 0.0
        %1724 = vmatprep.subr.mxu0 0.0
        %1725 = vmatpush1.xpose.msra.mxu0 0.0
        %1726 = vmatprep.subr.mxu0 0.0
        %1727 = vmatpush1.xpose.msra.mxu0 0.0
        %1728 = vmatprep.subr.mxu0 0.0
        %1729 = vmatpush1.xpose.msra.mxu0 0.0
        %1730 = vmatprep.mubr.f32.mxu0 0.0
        %1731 = vmatmul.mubr.f32.gmra.mrb[0].mxu0 %v881
        %v1732 = vpop.f32.mrb[0].mxu0
        %v1733 = vadd.f32 %v1662, %v1732
        %v1734 = vpop.f32.mrb[0].mxu0
        %v1735 = vadd.f32 %v1664, %v1734
        %1736 = vdwg.mxu0
        %1737 = vmatprep.subr.mxu0 %v719
        %1738 = vmatpush1.xpose.msra.mxu0 %v718
        %1739 = vmatprep.subr.mxu0 %v722
        %1740 = vmatpush1.xpose.msra.mxu0 %v721
        %1741 = vmatprep.subr.mxu0 %v725
        %1742 = vmatpush1.xpose.msra.mxu0 %v724
        %1743 = vmatprep.subr.mxu0 %v728
        %1744 = vmatpush1.xpose.msra.mxu0 %v727
        %1745 = vmatprep.subr.mxu0 %v731
        %1746 = vmatpush1.xpose.msra.mxu0 %v730
        %1747 = vmatprep.subr.mxu0 %v734
        %1748 = vmatpush1.xpose.msra.mxu0 %v733
        %1749 = vmatprep.subr.mxu0 %v737
        %1750 = vmatpush1.xpose.msra.mxu0 %v736
        %1751 = vmatprep.subr.mxu0 %v740
        %1752 = vmatpush1.xpose.msra.mxu0 %v739
        %1753 = vmatprep.subr.mxu0 %v743
        %1754 = vmatpush1.xpose.msra.mxu0 %v742
        %1755 = vmatprep.subr.mxu0 %v746
        %1756 = vmatpush1.xpose.msra.mxu0 %v745
        %1757 = vmatprep.subr.mxu0 %v749
        %1758 = vmatpush1.xpose.msra.mxu0 %v748
        %1759 = vmatprep.subr.mxu0 %v752
        %1760 = vmatpush1.xpose.msra.mxu0 %v751
        %1761 = vmatprep.subr.mxu0 %v755
        %1762 = vmatpush1.xpose.msra.mxu0 %v754
        %1763 = vmatprep.subr.mxu0 %v758
        %1764 = vmatpush1.xpose.msra.mxu0 %v757
        %1765 = vmatprep.subr.mxu0 %v761
        %1766 = vmatpush1.xpose.msra.mxu0 %v760
        %1767 = vmatprep.subr.mxu0 %v764
        %1768 = vmatpush1.xpose.msra.mxu0 %v763
        %1769 = vmatprep.subr.mxu0 %v767
        %1770 = vmatpush1.xpose.msra.mxu0 %v766
        %1771 = vmatprep.subr.mxu0 %v770
        %1772 = vmatpush1.xpose.msra.mxu0 %v769
        %1773 = vmatprep.subr.mxu0 %v773
        %1774 = vmatpush1.xpose.msra.mxu0 %v772
        %1775 = vmatprep.subr.mxu0 %v776
        %1776 = vmatpush1.xpose.msra.mxu0 %v775
        %1777 = vmatprep.subr.mxu0 %v779
        %1778 = vmatpush1.xpose.msra.mxu0 %v778
        %1779 = vmatprep.subr.mxu0 %v782
        %1780 = vmatpush1.xpose.msra.mxu0 %v781
        %1781 = vmatprep.subr.mxu0 %v785
        %1782 = vmatpush1.xpose.msra.mxu0 %v784
        %1783 = vmatprep.subr.mxu0 %v788
        %1784 = vmatpush1.xpose.msra.mxu0 %v787
        %1785 = vmatprep.subr.mxu0 %v791
        %1786 = vmatpush1.xpose.msra.mxu0 %v790
        %1787 = vmatprep.subr.mxu0 0.0
        %1788 = vmatpush1.xpose.msra.mxu0 0.0
        %1789 = vmatprep.subr.mxu0 0.0
        %1790 = vmatpush1.xpose.msra.mxu0 0.0
        %1791 = vmatprep.subr.mxu0 0.0
        %1792 = vmatpush1.xpose.msra.mxu0 0.0
        %1793 = vmatprep.subr.mxu0 0.0
        %1794 = vmatpush1.xpose.msra.mxu0 0.0
        %1795 = vmatprep.subr.mxu0 0.0
        %1796 = vmatpush1.xpose.msra.mxu0 0.0
        %1797 = vmatprep.subr.mxu0 0.0
        %1798 = vmatpush1.xpose.msra.mxu0 0.0
        %1799 = vmatprep.subr.mxu0 0.0
        %1800 = vmatpush1.xpose.msra.mxu0 0.0
        %1801 = vmatprep.mubr.f32.mxu0 %v877
        %1802 = vmatmul.mubr.f32.gmra.mrb[0].mxu0 %v873
        %v1803 = vpop.f32.mrb[0].mxu0
        %v1804 = vadd.f32 0.0, %v1803
        %v1805 = vpop.f32.mrb[0].mxu0
        %v1806 = vadd.f32 0.0, %v1805
        %1807 = vdwg.mxu0
        %1808 = vmatprep.subr.mxu0 0.0
        %1809 = vmatpush1.xpose.msra.mxu0 %v720
        %1810 = vmatprep.subr.mxu0 0.0
        %1811 = vmatpush1.xpose.msra.mxu0 %v723
        %1812 = vmatprep.subr.mxu0 0.0
        %1813 = vmatpush1.xpose.msra.mxu0 %v726
        %1814 = vmatprep.subr.mxu0 0.0
        %1815 = vmatpush1.xpose.msra.mxu0 %v729
        %1816 = vmatprep.subr.mxu0 0.0
        %1817 = vmatpush1.xpose.msra.mxu0 %v732
        %1818 = vmatprep.subr.mxu0 0.0
        %1819 = vmatpush1.xpose.msra.mxu0 %v735
        %1820 = vmatprep.subr.mxu0 0.0
        %1821 = vmatpush1.xpose.msra.mxu0 %v738
        %1822 = vmatprep.subr.mxu0 0.0
        %1823 = vmatpush1.xpose.msra.mxu0 %v741
        %1824 = vmatprep.subr.mxu0 0.0
        %1825 = vmatpush1.xpose.msra.mxu0 %v744
        %1826 = vmatprep.subr.mxu0 0.0
        %1827 = vmatpush1.xpose.msra.mxu0 %v747
        %1828 = vmatprep.subr.mxu0 0.0
        %1829 = vmatpush1.xpose.msra.mxu0 %v750
        %1830 = vmatprep.subr.mxu0 0.0
        %1831 = vmatpush1.xpose.msra.mxu0 %v753
        %1832 = vmatprep.subr.mxu0 0.0
        %1833 = vmatpush1.xpose.msra.mxu0 %v756
        %1834 = vmatprep.subr.mxu0 0.0
        %1835 = vmatpush1.xpose.msra.mxu0 %v759
        %1836 = vmatprep.subr.mxu0 0.0
        %1837 = vmatpush1.xpose.msra.mxu0 %v762
        %1838 = vmatprep.subr.mxu0 0.0
        %1839 = vmatpush1.xpose.msra.mxu0 %v765
        %1840 = vmatprep.subr.mxu0 0.0
        %1841 = vmatpush1.xpose.msra.mxu0 %v768
        %1842 = vmatprep.subr.mxu0 0.0
        %1843 = vmatpush1.xpose.msra.mxu0 %v771
        %1844 = vmatprep.subr.mxu0 0.0
        %1845 = vmatpush1.xpose.msra.mxu0 %v774
        %1846 = vmatprep.subr.mxu0 0.0
        %1847 = vmatpush1.xpose.msra.mxu0 %v777
        %1848 = vmatprep.subr.mxu0 0.0
        %1849 = vmatpush1.xpose.msra.mxu0 %v780
        %1850 = vmatprep.subr.mxu0 0.0
        %1851 = vmatpush1.xpose.msra.mxu0 %v783
        %1852 = vmatprep.subr.mxu0 0.0
        %1853 = vmatpush1.xpose.msra.mxu0 %v786
        %1854 = vmatprep.subr.mxu0 0.0
        %1855 = vmatpush1.xpose.msra.mxu0 %v789
        %1856 = vmatprep.subr.mxu0 0.0
        %1857 = vmatpush1.xpose.msra.mxu0 %v792
        %1858 = vmatprep.subr.mxu0 0.0
        %1859 = vmatpush1.xpose.msra.mxu0 0.0
        %1860 = vmatprep.subr.mxu0 0.0
        %1861 = vmatpush1.xpose.msra.mxu0 0.0
        %1862 = vmatprep.subr.mxu0 0.0
        %1863 = vmatpush1.xpose.msra.mxu0 0.0
        %1864 = vmatprep.subr.mxu0 0.0
        %1865 = vmatpush1.xpose.msra.mxu0 0.0
        %1866 = vmatprep.subr.mxu0 0.0
        %1867 = vmatpush1.xpose.msra.mxu0 0.0
        %1868 = vmatprep.subr.mxu0 0.0
        %1869 = vmatpush1.xpose.msra.mxu0 0.0
        %1870 = vmatprep.subr.mxu0 0.0
        %1871 = vmatpush1.xpose.msra.mxu0 0.0
        %1872 = vmatprep.mubr.f32.mxu0 0.0
        %1873 = vmatmul.mubr.f32.gmra.mrb[0].mxu0 %v881
        %v1874 = vpop.f32.mrb[0].mxu0
        %v1875 = vadd.f32 %v1804, %v1874
        %v1876 = vpop.f32.mrb[0].mxu0
        %v1877 = vadd.f32 %v1806, %v1876
        %1878 = vdwg.mxu0
        %1879 = vmatprep.subr.mxu0 %v794
        %1880 = vmatpush1.xpose.msra.mxu0 %v793
        %1881 = vmatprep.subr.mxu0 %v797
        %1882 = vmatpush1.xpose.msra.mxu0 %v796
        %1883 = vmatprep.subr.mxu0 %v800
        %1884 = vmatpush1.xpose.msra.mxu0 %v799
        %1885 = vmatprep.subr.mxu0 %v803
        %1886 = vmatpush1.xpose.msra.mxu0 %v802
        %1887 = vmatprep.subr.mxu0 %v806
        %1888 = vmatpush1.xpose.msra.mxu0 %v805
        %1889 = vmatprep.subr.mxu0 %v809
        %1890 = vmatpush1.xpose.msra.mxu0 %v808
        %1891 = vmatprep.subr.mxu0 %v812
        %1892 = vmatpush1.xpose.msra.mxu0 %v811
        %1893 = vmatprep.subr.mxu0 %v815
        %1894 = vmatpush1.xpose.msra.mxu0 %v814
        %1895 = vmatprep.subr.mxu0 %v818
        %1896 = vmatpush1.xpose.msra.mxu0 %v817
        %1897 = vmatprep.subr.mxu0 %v821
        %1898 = vmatpush1.xpose.msra.mxu0 %v820
        %1899 = vmatprep.subr.mxu0 %v824
        %1900 = vmatpush1.xpose.msra.mxu0 %v823
        %1901 = vmatprep.subr.mxu0 %v827
        %1902 = vmatpush1.xpose.msra.mxu0 %v826
        %1903 = vmatprep.subr.mxu0 %v830
        %1904 = vmatpush1.xpose.msra.mxu0 %v829
        %1905 = vmatprep.subr.mxu0 %v833
        %1906 = vmatpush1.xpose.msra.mxu0 %v832
        %1907 = vmatprep.subr.mxu0 %v836
        %1908 = vmatpush1.xpose.msra.mxu0 %v835
        %1909 = vmatprep.subr.mxu0 %v839
        %1910 = vmatpush1.xpose.msra.mxu0 %v838
        %1911 = vmatprep.subr.mxu0 %v842
        %1912 = vmatpush1.xpose.msra.mxu0 %v841
        %1913 = vmatprep.subr.mxu0 %v845
        %1914 = vmatpush1.xpose.msra.mxu0 %v844
        %1915 = vmatprep.subr.mxu0 %v848
        %1916 = vmatpush1.xpose.msra.mxu0 %v847
        %1917 = vmatprep.subr.mxu0 %v851
        %1918 = vmatpush1.xpose.msra.mxu0 %v850
        %1919 = vmatprep.subr.mxu0 %v854
        %1920 = vmatpush1.xpose.msra.mxu0 %v853
        %1921 = vmatprep.subr.mxu0 %v857
        %1922 = vmatpush1.xpose.msra.mxu0 %v856
        %1923 = vmatprep.subr.mxu0 %v860
        %1924 = vmatpush1.xpose.msra.mxu0 %v859
        %1925 = vmatprep.subr.mxu0 %v863
        %1926 = vmatpush1.xpose.msra.mxu0 %v862
        %1927 = vmatprep.subr.mxu0 %v866
        %1928 = vmatpush1.xpose.msra.mxu0 %v865
        %1929 = vmatprep.subr.mxu0 0.0
        %1930 = vmatpush1.xpose.msra.mxu0 0.0
        %1931 = vmatprep.subr.mxu0 0.0
        %1932 = vmatpush1.xpose.msra.mxu0 0.0
        %1933 = vmatprep.subr.mxu0 0.0
        %1934 = vmatpush1.xpose.msra.mxu0 0.0
        %1935 = vmatprep.subr.mxu0 0.0
        %1936 = vmatpush1.xpose.msra.mxu0 0.0
        %1937 = vmatprep.subr.mxu0 0.0
        %1938 = vmatpush1.xpose.msra.mxu0 0.0
        %1939 = vmatprep.subr.mxu0 0.0
        %1940 = vmatpush1.xpose.msra.mxu0 0.0
        %1941 = vmatprep.subr.mxu0 0.0
        %1942 = vmatpush1.xpose.msra.mxu0 0.0
        %1943 = vmatprep.mubr.f32.mxu0 %v877
        %1944 = vmatmul.mubr.f32.gmra.mrb[0].mxu0 %v873
        %v1945 = vpop.f32.mrb[0].mxu0
        %v1946 = vadd.f32 0.0, %v1945
        %v1947 = vpop.f32.mrb[0].mxu0
        %v1948 = vadd.f32 0.0, %v1947
        %1949 = vdwg.mxu0
        %1950 = vmatprep.subr.mxu0 0.0
        %1951 = vmatpush1.xpose.msra.mxu0 %v795
        %1952 = vmatprep.subr.mxu0 0.0
        %1953 = vmatpush1.xpose.msra.mxu0 %v798
        %1954 = vmatprep.subr.mxu0 0.0
        %1955 = vmatpush1.xpose.msra.mxu0 %v801
        %1956 = vmatprep.subr.mxu0 0.0
        %1957 = vmatpush1.xpose.msra.mxu0 %v804
        %1958 = vmatprep.subr.mxu0 0.0
        %1959 = vmatpush1.xpose.msra.mxu0 %v807
        %1960 = vmatprep.subr.mxu0 0.0
        %1961 = vmatpush1.xpose.msra.mxu0 %v810
        %1962 = vmatprep.subr.mxu0 0.0
        %1963 = vmatpush1.xpose.msra.mxu0 %v813
        %1964 = vmatprep.subr.mxu0 0.0
        %1965 = vmatpush1.xpose.msra.mxu0 %v816
        %1966 = vmatprep.subr.mxu0 0.0
        %1967 = vmatpush1.xpose.msra.mxu0 %v819
        %1968 = vmatprep.subr.mxu0 0.0
        %1969 = vmatpush1.xpose.msra.mxu0 %v822
        %1970 = vmatprep.subr.mxu0 0.0
        %1971 = vmatpush1.xpose.msra.mxu0 %v825
        %1972 = vmatprep.subr.mxu0 0.0
        %1973 = vmatpush1.xpose.msra.mxu0 %v828
        %1974 = vmatprep.subr.mxu0 0.0
        %1975 = vmatpush1.xpose.msra.mxu0 %v831
        %1976 = vmatprep.subr.mxu0 0.0
        %1977 = vmatpush1.xpose.msra.mxu0 %v834
        %1978 = vmatprep.subr.mxu0 0.0
        %1979 = vmatpush1.xpose.msra.mxu0 %v837
        %1980 = vmatprep.subr.mxu0 0.0
        %1981 = vmatpush1.xpose.msra.mxu0 %v840
        %1982 = vmatprep.subr.mxu0 0.0
        %1983 = vmatpush1.xpose.msra.mxu0 %v843
        %1984 = vmatprep.subr.mxu0 0.0
        %1985 = vmatpush1.xpose.msra.mxu0 %v846
        %1986 = vmatprep.subr.mxu0 0.0
        %1987 = vmatpush1.xpose.msra.mxu0 %v849
        %1988 = vmatprep.subr.mxu0 0.0
        %1989 = vmatpush1.xpose.msra.mxu0 %v852
        %1990 = vmatprep.subr.mxu0 0.0
        %1991 = vmatpush1.xpose.msra.mxu0 %v855
        %1992 = vmatprep.subr.mxu0 0.0
        %1993 = vmatpush1.xpose.msra.mxu0 %v858
        %1994 = vmatprep.subr.mxu0 0.0
        %1995 = vmatpush1.xpose.msra.mxu0 %v861
        %1996 = vmatprep.subr.mxu0 0.0
        %1997 = vmatpush1.xpose.msra.mxu0 %v864
        %1998 = vmatprep.subr.mxu0 0.0
        %1999 = vmatpush1.xpose.msra.mxu0 %v867
        %2000 = vmatprep.subr.mxu0 0.0
        %2001 = vmatpush1.xpose.msra.mxu0 0.0
        %2002 = vmatprep.subr.mxu0 0.0
        %2003 = vmatpush1.xpose.msra.mxu0 0.0
        %2004 = vmatprep.subr.mxu0 0.0
        %2005 = vmatpush1.xpose.msra.mxu0 0.0
        %2006 = vmatprep.subr.mxu0 0.0
        %2007 = vmatpush1.xpose.msra.mxu0 0.0
        %2008 = vmatprep.subr.mxu0 0.0
        %2009 = vmatpush1.xpose.msra.mxu0 0.0
        %2010 = vmatprep.subr.mxu0 0.0
        %2011 = vmatpush1.xpose.msra.mxu0 0.0
        %2012 = vmatprep.subr.mxu0 0.0
        %2013 = vmatpush1.xpose.msra.mxu0 0.0
        %2014 = vmatprep.mubr.f32.mxu0 0.0
        %2015 = vmatmul.mubr.f32.gmra.mrb[0].mxu0 %v881
        %v2016 = vpop.f32.mrb[0].mxu0
        %v2017 = vadd.f32 %v1946, %v2016
        %v2018 = vpop.f32.mrb[0].mxu0
        %v2019 = vadd.f32 %v1948, %v2018
        %2020 = vdwg.mxu0
        %s2021 = sld [smem:[#allocation2]]
        %v2022 = vstv %s2021
        %v2023 = vadd.f32 %v1023, %v2022
        %v2024 = vadd.f32 %v1025, %v2022
        %v2025 = vadd.f32 %v1165, %v2022
        %v2026 = vadd.f32 %v1167, %v2022
        %v2027 = vadd.f32 %v1307, %v2022
        %v2028 = vadd.f32 %v1309, %v2022
        %v2029 = vadd.f32 %v1449, %v2022
        %v2030 = vadd.f32 %v1451, %v2022
        %v2031 = vadd.f32 %v1591, %v2022
        %v2032 = vadd.f32 %v1593, %v2022
        %v2033 = vadd.f32 %v1733, %v2022
        %v2034 = vadd.f32 %v1735, %v2022
        %v2035 = vadd.f32 %v1875, %v2022
        %v2036 = vadd.f32 %v1877, %v2022
        %v2037 = vadd.f32 %v2017, %v2022
        %v2038 = vadd.f32 %v2019, %v2022
        %v2039 = vxor.u32 %v2023, 2147483648
        %v2040 = vxor.u32 %v2024, 2147483648
        %v2041 = vxor.u32 %v2025, 2147483648
        %v2042 = vxor.u32 %v2026, 2147483648
        %v2043 = vxor.u32 %v2027, 2147483648
        %v2044 = vxor.u32 %v2028, 2147483648
        %v2045 = vxor.u32 %v2029, 2147483648
        %v2046 = vxor.u32 %v2030, 2147483648
        %v2047 = vxor.u32 %v2031, 2147483648
        %v2048 = vxor.u32 %v2032, 2147483648
        %v2049 = vxor.u32 %v2033, 2147483648
        %v2050 = vxor.u32 %v2034, 2147483648
        %v2051 = vxor.u32 %v2035, 2147483648
        %v2052 = vxor.u32 %v2036, 2147483648
        %v2053 = vxor.u32 %v2037, 2147483648
        %v2054 = vxor.u32 %v2038, 2147483648
        %v2055 = vmul.f32 %v2039, 1.442695
        %v2056 = vpow.pop %v2055
        %v2057 = vmul.f32 %v2040, 1.442695
        %v2058 = vpow.pop %v2057
        %v2059 = vmul.f32 %v2041, 1.442695
        %v2060 = vpow.pop %v2059
        %v2061 = vmul.f32 %v2042, 1.442695
        %v2062 = vpow.pop %v2061
        %v2063 = vmul.f32 %v2043, 1.442695
        %v2064 = vpow.pop %v2063
        %v2065 = vmul.f32 %v2044, 1.442695
        %v2066 = vpow.pop %v2065
        %v2067 = vmul.f32 %v2045, 1.442695
        %v2068 = vpow.pop %v2067
        %v2069 = vmul.f32 %v2046, 1.442695
        %v2070 = vpow.pop %v2069
        %v2071 = vmul.f32 %v2047, 1.442695
        %v2072 = vpow.pop %v2071
        %v2073 = vmul.f32 %v2048, 1.442695
        %v2074 = vpow.pop %v2073
        %v2075 = vmul.f32 %v2049, 1.442695
        %v2076 = vpow.pop %v2075
        %v2077 = vmul.f32 %v2050, 1.442695
        %v2078 = vpow.pop %v2077
        %v2079 = vmul.f32 %v2051, 1.442695
        %v2080 = vpow.pop %v2079
        %v2081 = vmul.f32 %v2052, 1.442695
        %v2082 = vpow.pop %v2081
        %v2083 = vmul.f32 %v2053, 1.442695
        %v2084 = vpow.pop %v2083
        %v2085 = vmul.f32 %v2054, 1.442695
        %v2086 = vpow.pop %v2085
        %v2087 = vadd.f32 %v2056, 1.0
        %v2088 = vadd.f32 %v2058, 1.0
        %v2089 = vadd.f32 %v2060, 1.0
        %v2090 = vadd.f32 %v2062, 1.0
        %v2091 = vadd.f32 %v2064, 1.0
        %v2092 = vadd.f32 %v2066, 1.0
        %v2093 = vadd.f32 %v2068, 1.0
        %v2094 = vadd.f32 %v2070, 1.0
        %v2095 = vadd.f32 %v2072, 1.0
        %v2096 = vadd.f32 %v2074, 1.0
        %v2097 = vadd.f32 %v2076, 1.0
        %v2098 = vadd.f32 %v2078, 1.0
        %v2099 = vadd.f32 %v2080, 1.0
        %v2100 = vadd.f32 %v2082, 1.0
        %v2101 = vadd.f32 %v2084, 1.0
        %v2102 = vadd.f32 %v2086, 1.0
        %v2103 = vrcp.pop %v2087
        %v2104 = vmul.f32 1.0, %v2103
        %v2105 = vrcp.pop %v2088
        %v2106 = vmul.f32 1.0, %v2105
        %v2107 = vrcp.pop %v2089
        %v2108 = vmul.f32 1.0, %v2107
        %v2109 = vrcp.pop %v2090
        %v2110 = vmul.f32 1.0, %v2109
        %v2111 = vrcp.pop %v2091
        %v2112 = vmul.f32 1.0, %v2111
        %v2113 = vrcp.pop %v2092
        %v2114 = vmul.f32 1.0, %v2113
        %v2115 = vrcp.pop %v2093
        %v2116 = vmul.f32 1.0, %v2115
        %v2117 = vrcp.pop %v2094
        %v2118 = vmul.f32 1.0, %v2117
        %v2119 = vrcp.pop %v2095
        %v2120 = vmul.f32 1.0, %v2119
        %v2121 = vrcp.pop %v2096
        %v2122 = vmul.f32 1.0, %v2121
        %v2123 = vrcp.pop %v2097
        %v2124 = vmul.f32 1.0, %v2123
        %v2125 = vrcp.pop %v2098
        %v2126 = vmul.f32 1.0, %v2125
        %v2127 = vrcp.pop %v2099
        %v2128 = vmul.f32 1.0, %v2127
        %v2129 = vrcp.pop %v2100
        %v2130 = vmul.f32 1.0, %v2129
        %v2131 = vrcp.pop %v2101
        %v2132 = vmul.f32 1.0, %v2131
        %v2133 = vrcp.pop %v2102
        %v2134 = vmul.f32 1.0, %v2133
        %v2151 = vrot.slane %v2108, 7
        %vm2152 = vcmask 1041409
        %v2153 = vsel %vm2152, %v2151, %v2104
        %v2154 = vrot.slane %v2112, 6
        %vm2155 = vcmask 1042434
        %v2156 = vsel %vm2155, %v2154, %v2153
        %v2157 = vrot.slane %v2116, 5
        %vm2158 = vcmask 1043459
        %v2159 = vsel %vm2158, %v2157, %v2156
        %v2160 = vrot.slane %v2120, 4
        %vm2161 = vcmask 1044484
        %v2162 = vsel %vm2161, %v2160, %v2159
        %v2163 = vrot.slane %v2124, 3
        %vm2164 = vcmask 1045509
        %v2165 = vsel %vm2164, %v2163, %v2162
        %v2166 = vrot.slane %v2128, 2
        %vm2167 = vcmask 1046534
        %v2168 = vsel %vm2167, %v2166, %v2165
        %v2169 = vrot.slane %v2132, 1
        %vm2170 = vcmask 1047559
        %v2171 = vsel %vm2170, %v2169, %v2168
        %v2172 = vrot.slane %v2110, 7
        %v2173 = vsel %vm2152, %v2172, %v2106
        %v2174 = vrot.slane %v2114, 6
        %v2175 = vsel %vm2155, %v2174, %v2173
        %v2176 = vrot.slane %v2118, 5
        %v2177 = vsel %vm2158, %v2176, %v2175
        %v2178 = vrot.slane %v2122, 4
        %v2179 = vsel %vm2161, %v2178, %v2177
        %v2180 = vrot.slane %v2126, 3
        %v2181 = vsel %vm2164, %v2180, %v2179
        %v2182 = vrot.slane %v2130, 2
        %v2183 = vsel %vm2167, %v2182, %v2181
        %v2184 = vrot.slane %v2134, 1
        %v2185 = vsel %vm2170, %v2184, %v2183
        %2188 = vst [vmem:[%s250] sm:$0xff] %v2171
        %vm2189 = vcmask 556032
        %2190 = vst.msk [vmem:[%s250 + $0x8] sm:$0xff] %vm2189, %v2185
        %v2191 = vld [vmem:[%s3] sm:$0xff]
        %v2192 = vld [vmem:[%s3 + $0x8] sm:$0xff]
        %v2193 = vld [vmem:[%s3 + $0x10] sm:$0xff]
        %v2194 = vld [vmem:[%s3 + $0x18] sm:$0xff]
        %v2195 = vld [vmem:[%s3 + $0x20] sm:$0xff]
        %v2196 = vld [vmem:[%s3 + $0x28] sm:$0xff]
        %v2197 = vld [vmem:[%s3 + $0x30] sm:$0xff]
        %v2198 = vld [vmem:[%s3 + $0x38] sm:$0xff]
        %v2199 = vld [vmem:[%s3 + $0x40] sm:$0xff]
        %v2200 = vld [vmem:[%s3 + $0x48] sm:$0xff]
        %v2201 = vld [vmem:[%s3 + $0x50] sm:$0xff]
        %v2202 = vld [vmem:[%s3 + $0x58] sm:$0xff]
        %v2203 = vld [vmem:[%s3 + $0x60] sm:$0xff]
        %v2204 = vld [vmem:[%s3 + $0x68] sm:$0xff]
        %v2205 = vld [vmem:[%s3 + $0x70] sm:$0xff]
        %v2206 = vld [vmem:[%s3 + $0x78] sm:$0xff]
        %v2207 = vld [vmem:[%s3 + $0x80] sm:$0xff]
        %v2208 = vld [vmem:[%s3 + $0x88] sm:$0xff]
        %v2209 = vld [vmem:[%s3 + $0x90] sm:$0xff]
        %v2210 = vld [vmem:[%s3 + $0x98] sm:$0xff]
        %v2211 = vld [vmem:[%s3 + $0xa0] sm:$0xff]
        %v2212 = vld [vmem:[%s3 + $0xa8] sm:$0xff]
        %v2213 = vld [vmem:[%s3 + $0xb0] sm:$0xff]
        %v2214 = vld [vmem:[%s3 + $0xb8] sm:$0xff]
        %v2215 = vld [vmem:[%s3 + $0xc0] sm:$0xf]
        %s2216 = sld [smem:[#allocation3]]
        %v2217 = vstv %s2216
        %v2218 = vsel %vm2189, %v2185, 0
        %vm2220 = vcmask 1043456
        %v2222 = vsel %vm2220, %v2215, 0
        %2224 = vmatprep.subr.mxu0 0.0
        %2225 = vmatpush1.msra.mxu0 %v2191
        %2226 = vmatprep.subr.mxu0 0.0
        %2227 = vmatpush1.msra.mxu0 %v2192
        %2228 = vmatprep.subr.mxu0 0.0
        %2229 = vmatpush1.msra.mxu0 %v2193
        %2230 = vmatprep.subr.mxu0 0.0
        %2231 = vmatpush1.msra.mxu0 %v2194
        %2232 = vmatprep.subr.mxu0 0.0
        %2233 = vmatpush1.msra.mxu0 %v2195
        %2234 = vmatprep.subr.mxu0 0.0
        %2235 = vmatpush1.msra.mxu0 %v2196
        %2236 = vmatprep.subr.mxu0 0.0
        %2237 = vmatpush1.msra.mxu0 %v2197
        %2238 = vmatprep.subr.mxu0 0.0
        %2239 = vmatpush1.msra.mxu0 %v2198
        %2240 = vmatprep.subr.mxu0 0.0
        %2241 = vmatpush1.msra.mxu0 %v2199
        %2242 = vmatprep.subr.mxu0 0.0
        %2243 = vmatpush1.msra.mxu0 %v2200
        %2244 = vmatprep.subr.mxu0 0.0
        %2245 = vmatpush1.msra.mxu0 %v2201
        %2246 = vmatprep.subr.mxu0 0.0
        %2247 = vmatpush1.msra.mxu0 %v2202
        %2248 = vmatprep.subr.mxu0 0.0
        %2249 = vmatpush1.msra.mxu0 %v2203
        %2250 = vmatprep.subr.mxu0 0.0
        %2251 = vmatpush1.msra.mxu0 %v2204
        %2252 = vmatprep.subr.mxu0 0.0
        %2253 = vmatpush1.msra.mxu0 %v2205
        %2254 = vmatprep.subr.mxu0 0.0
        %2255 = vmatpush1.msra.mxu0 %v2206
        %2256 = vmatprep.subr.mxu0 0.0
        %2257 = vmatpush1.msra.mxu0 %v2207
        %2258 = vmatprep.subr.mxu0 0.0
        %2259 = vmatpush1.msra.mxu0 %v2208
        %2260 = vmatprep.subr.mxu0 0.0
        %2261 = vmatpush1.msra.mxu0 %v2209
        %2262 = vmatprep.subr.mxu0 0.0
        %2263 = vmatpush1.msra.mxu0 %v2210
        %2264 = vmatprep.subr.mxu0 0.0
        %2265 = vmatpush1.msra.mxu0 %v2211
        %2266 = vmatprep.subr.mxu0 0.0
        %2267 = vmatpush1.msra.mxu0 %v2212
        %2268 = vmatprep.subr.mxu0 0.0
        %2269 = vmatpush1.msra.mxu0 %v2213
        %2270 = vmatprep.subr.mxu0 0.0
        %2271 = vmatpush1.msra.mxu0 %v2214
        %2272 = vmatprep.subr.mxu0 0.0
        %2273 = vmatpush1.msra.mxu0 %v2222
        %2274 = vmatprep.subr.mxu0 0.0
        %2275 = vmatpush1.msra.mxu0 0.0
        %2276 = vmatprep.subr.mxu0 0.0
        %2277 = vmatpush1.msra.mxu0 0.0
        %2278 = vmatprep.subr.mxu0 0.0
        %2279 = vmatpush1.msra.mxu0 0.0
        %2280 = vmatprep.subr.mxu0 0.0
        %2281 = vmatpush1.msra.mxu0 0.0
        %2282 = vmatprep.subr.mxu0 0.0
        %2283 = vmatpush1.msra.mxu0 0.0
        %2284 = vmatprep.subr.mxu0 0.0
        %2285 = vmatpush1.msra.mxu0 0.0
        %2286 = vmatprep.subr.mxu0 0.0
        %2287 = vmatpush1.msra.mxu0 0.0
        %2288 = vmatprep.mubr.f32.mxu0 %v2218
        %2289 = vmatmul.mubr.f32.gmra.mrb[0].mxu0 %v2171
        %v2290 = vpop.f32.mrb[0].mxu0
        %v2291 = vadd.f32 %v2217, %v2290
        %v2292 = vpop.f32.mrb[0].mxu0
        %2293 = vdwg.mxu0
        %v2294 = vxor.u32 %v2291, 2147483648
        %v2295 = vmul.f32 %v2294, 1.442695
        %v2296 = vpow.pop %v2295
        %v2297 = vadd.f32 %v2296, 1.0
        %v2298 = vrcp.pop %v2297
        %v2299 = vmul.f32 1.0, %v2298
        %vm2300 = vcmask 7168
        %2301 = vst.msk [vmem:[%s267] sm:$0xff] %vm2300, %v2299
        %s2302 = sand.u32 %s141, 1
        %s2303 = scalar_lea.sflag [#allocation5], %s2302
        %s2304 = sand.u32 %s141, 1
        %s2305 = smul.addr %s2304, 16
        %s2306 = scalar_lea.vmem [#allocation4], %s2305
        %p2307 = scmp.lt.s32.totalorder %s23, 1
        %s2308 = scalar_select %p2307, %s23, 1
        %s2309 = smul.addr %s2308, 8
        %s2310 = scalar_lea.vmem %s6, %s2309
        // Predicated region
        $region41: #{tpu_custom_call.1} parent=39 // pred_check
          %p2311 = pneg %p151
        $region42: #{tpu_custom_call.1} parent=39 // pred_check_branch
          %2313 = sbr.rel (%p2311) target = $region44
        $region43: #{tpu_custom_call.1} parent=39 // pred_region
          %s2315 = ssub.s32 256, 256
          %2316 = vsyncadd %s2303, %s2315
          %s2317 = smul.addr %s23, 2
          %s2318 = smul.addr %s2317, 128
          %s2319 = scalar_lea.hbm %s5, %s2318
          %s2321 = sshll.u32 %s2306, 4
          %s2322 = int_to_ptr.vmem [resolvable:$true] %s2321
          %2324 = dma.vmem_to_hbm [thread:$0]  %s2322, 256, %s2319, %s2303
        $region44: #{tpu_custom_call.1} parent=39 // pred_fallthru
          _
        // Predicated region
        $region45: #{tpu_custom_call.1} parent=39 // pred_check
          %p2325 = pneg %p177
        $region46: #{tpu_custom_call.1} parent=39 // pred_check_branch
          %2327 = sbr.rel (%p2325) target = $region48
        $region47: #{tpu_custom_call.1} parent=39 // pred_region
          _
        $region48: #{tpu_custom_call.1} parent=39 // pred_fallthru
          _
      $region40: #{tpu_custom_call.1} parent=5 // pred_fallthru
        _
      %p2328 = scmp.le.s32.totalorder 2, %s18
      // Predicated region
      $region49: #{tpu_custom_call.1} parent=5 // pred_check
        %p2329 = pneg %p2328
      $region50: #{tpu_custom_call.1} parent=5 // pred_check_branch
        %2331 = sbr.rel (%p2329) target = $region52
      $region51: #{tpu_custom_call.1} parent=5 // pred_region
        %s2332 = ssub.s32 %s18, 2
        // Predicated region
        $region53: #{tpu_custom_call.1} parent=51 // pred_check
          %p2333 = pneg %p157
        $region54: #{tpu_custom_call.1} parent=51 // pred_check_branch
          %2335 = sbr.rel (%p2333) target = $region56
        $region55: #{tpu_custom_call.1} parent=51 // pred_region
          %s2336 = sand.u32 %s142, 1
          %s2337 = scalar_lea.sflag [#allocation5], %s2336
          %s2338 = sand.u32 %s142, 1
          %s2339 = smul.addr %s2338, 16
          %s2340 = scalar_lea.vmem [#allocation4], %s2339
          %2341 = dma.done %s2337, 256
        $region56: #{tpu_custom_call.1} parent=51 // pred_fallthru
          _
        // Predicated region
        $region57: #{tpu_custom_call.1} parent=51 // pred_check
          %p2342 = pneg %p183
        $region58: #{tpu_custom_call.1} parent=51 // pred_check_branch
          %2344 = sbr.rel (%p2342) target = $region60
        $region59: #{tpu_custom_call.1} parent=51 // pred_region
          %p2345 = scmp.lt.s32.totalorder %s24, 1
          %s2346 = scalar_select %p2345, %s24, 1
          %s2347 = smul.addr %s2346, 8
          %s2348 = scalar_lea.vmem %s6, %s2347
        $region60: #{tpu_custom_call.1} parent=51 // pred_fallthru
          _
      $region52: #{tpu_custom_call.1} parent=5 // pred_fallthru
        _
    $region6: #{tpu_custom_call.1} parent=1 // loop_footer
      %s22 = sadd.s32 1, %s18
    $region7: #{tpu_custom_call.1} parent=1 // loop_footer_branch
      %17 = sbr.rel target = $region3
    $region8: #{tpu_custom_call.1} parent=1 // loop_exit
      _
    %2349 = vsyncpa [#allocation5], 1
    %s2350 = scalar_lea.sflag [#allocation5], 1
    %2351 = vsyncpa %s2350, 1

</llo_original>
